<compile_context>
chip_gen: v5e
topology: v5e:2x2
jax: 0.10.0
libtpu: 0.0.40
codegen_flags: <defaults>
</compile_context>

<pallas_src>
import functools

import jax
import jax.numpy as jnp
from jax.experimental import pallas as pl
from jax.experimental.pallas import tpu as pltpu


def _lrelu(x, alpha):
    # max(x, alpha*x) == LeakyReLU for 0 < alpha < 1: mul + max (no select).
    return jnp.maximum(x, alpha * x)


def _round_up(a, b):
    return (a + b - 1) // b * b


def _default_act_dtype():
    """bf16 activations on chips with bf16 VPU lanes (v6e/v7x), else f32."""
    try:
        kind = jax.devices()[0].device_kind.lower()
    except Exception:
        return jnp.float32
    if "v6" in kind or "v7" in kind:
        return jnp.bfloat16
    return jnp.float32


def smoothnet_kernel(x_ref, we_ref, be_ref,
                     w1s_ref, b1s_ref, w2s_ref, b2s_ref,
                     wd_ref, bd_ref, o_ref, *, num_blocks, act_dtype):
    # ----- encoder: Linear(window -> hidden) + LeakyReLU(0.1) -----
    x = x_ref[...].astype(jnp.bfloat16)               # bf16 MXU operand
    h = jnp.dot(x, we_ref[...], preferred_element_type=jnp.float32) + be_ref[...]
    h = _lrelu(h, 0.1).astype(act_dtype)              # f32 bias add / lrelu, one cast

    # ----- residual blocks (dropout p=0.5 is identity in eval mode) -----
    for blk in range(num_blocks):                     # statically unrolled
        t = jnp.dot(h.astype(jnp.bfloat16), w1s_ref[blk],
                    preferred_element_type=jnp.float32) + b1s_ref[blk]
        t = _lrelu(t, 0.2).astype(act_dtype)
        t = jnp.dot(t.astype(jnp.bfloat16), w2s_ref[blk],
                    preferred_element_type=jnp.float32) + b2s_ref[blk]
        t = _lrelu(t, 0.2).astype(act_dtype)
        h = h + t                                     # residual add in act_dtype

    # ----- decoder: Linear(hidden -> output_size), lane-padded to 128 -----
    y = jnp.dot(h.astype(jnp.bfloat16), wd_ref[...],
                preferred_element_type=jnp.float32) + bd_ref[...]
    o_ref[...] = y.astype(o_ref.dtype)                # bf16 lane-dense writeback


def prepare_params(params):
    """One-time host-side weight prep: bf16 weights, f32 biases, decoder
    weight/bias zero-padded to a 128-lane multiple.  Call once and cache;
    do NOT redo this per forward call."""
    we, be, w1s, b1s, w2s, b2s, wd, bd = params
    output_size = wd.shape[1]
    out_pad = _round_up(output_size, 128)
    pad = ((0, 0), (0, out_pad - output_size))
    return (
        we.astype(jnp.bfloat16),
        be.astype(jnp.float32),
        w1s.astype(jnp.bfloat16),
        b1s.astype(jnp.float32),
        w2s.astype(jnp.bfloat16),
        b2s.astype(jnp.float32),
        jnp.pad(wd, pad).astype(jnp.bfloat16),
        jnp.pad(bd, pad).astype(jnp.float32),
    )


def smoothnet_forward(x, prepared, output_size, *, tile_rows=1024, act_dtype=None):
    """x: (N, C, T) float array; prepared: output of prepare_params(params).
    Returns (N, C, output_size) float32."""
    we_b, be_f, w1s_b, b1s_f, w2s_b, b2s_f, wd_b, bd_f = prepared
    N, C, T = x.shape
    window_size, hidden = we_b.shape
    num_blocks, _, res_hidden = w1s_b.shape
    out_pad = wd_b.shape[1]
    assert T == window_size, "input sequence length must equal window_size"
    assert output_size <= out_pad

    if act_dtype is None:
        act_dtype = _default_act_dtype()

    M = N * C
    M8 = _round_up(M, 8)
    tr = max(8, _round_up(min(tile_rows, M8), 8))
    # Megacore: keep >= 2 grid steps whenever there is enough work so that
    # v7x's two TensorCores both get rows (the row axis is 'parallel').
    if M8 >= 16:
        tr = min(tr, _round_up((M8 + 1) // 2, 8))
    M_pad = _round_up(M, tr)
    grid = M_pad // tr

    x2d = x.reshape(M, T)
    if M_pad != M:
        # Padded rows compute lrelu(bias)-derived values that get sliced off
        # below -- wasted but harmless.
        x2d = jnp.pad(x2d, ((0, M_pad - M), (0, 0)))

    kernel = functools.partial(smoothnet_kernel, num_blocks=num_blocks,
                               act_dtype=act_dtype)

    # Cost estimate so XLA can schedule surrounding ops around the custom call.
    flops = 2 * M_pad * (T * hidden
                         + num_blocks * 2 * hidden * res_hidden
                         + hidden * out_pad)
    weight_bytes = 2 * (T * hidden
                        + num_blocks * 2 * hidden * res_hidden
                        + hidden * out_pad)
    bias_bytes = 4 * (hidden + num_blocks * (hidden + res_hidden) + out_pad)
    bytes_accessed = (M_pad * T * x2d.dtype.itemsize      # input read
                      + M_pad * out_pad * 2                # bf16 output write
                      + weight_bytes + bias_bytes)
    cost = pl.CostEstimate(flops=int(flops), transcendentals=0,
                           bytes_accessed=int(bytes_accessed))

    # Explicit scoped-VMEM limit (v5e defaults to 16 MiB): double-buffered
    # x/out tiles + single-buffered resident weights + activation scratch,
    # plus generous headroom.  Still tiny (<~30 MiB) even at 2048-row tiles.
    act_b = jnp.dtype(act_dtype).itemsize
    vmem_est = (2 * tr * T * x2d.dtype.itemsize
                + 2 * tr * out_pad * 2
                + weight_bytes + bias_bytes
                + tr * (hidden * (4 + 2 * act_b) + res_hidden * (4 + act_b)))
    vmem_limit = int(min(64 * 2**20, vmem_est + 16 * 2**20))

    # Constant-index weights/biases never change across grid steps ->
    # single-buffer them.
    resident = functools.partial(pl.BlockSpec, pipeline_mode=pl.Buffered(1))

    out2d = pl.pallas_call(
        kernel,
        out_shape=jax.ShapeDtypeStruct((M_pad, out_pad), jnp.bfloat16),
        grid_spec=pltpu.PrefetchScalarGridSpec(
            num_scalar_prefetch=0,
            grid=(grid,),
            in_specs=[
                pl.BlockSpec((tr, T), lambda i: (i, 0)),                            # x rows
                resident((window_size, hidden), lambda i: (0, 0)),                  # We  (bf16)
                resident((1, hidden), lambda i: (0, 0)),                            # be  (f32)
                resident((num_blocks, hidden, res_hidden), lambda i: (0, 0, 0)),    # W1 stack
                resident((num_blocks, 1, res_hidden), lambda i: (0, 0, 0)),         # b1 stack
                resident((num_blocks, res_hidden, hidden), lambda i: (0, 0, 0)),    # W2 stack
                resident((num_blocks, 1, hidden), lambda i: (0, 0, 0)),             # b2 stack
                resident((hidden, out_pad), lambda i: (0, 0)),                      # Wd (padded)
                resident((1, out_pad), lambda i: (0, 0)),                           # bd (padded)
            ],
            out_specs=pl.BlockSpec((tr, out_pad), lambda i: (i, 0)),
        ),
        compiler_params=pltpu.CompilerParams(
            dimension_semantics=("parallel",),
            vmem_limit_bytes=vmem_limit),
        cost_estimate=cost,
    )(x2d, we_b, be_f, w1s_b, b1s_f, w2s_b, b2s_f, wd_b, bd_f)

    return out2d[:M, :output_size].astype(jnp.float32).reshape(N, C, output_size)


def init_params(key, window_size, output_size, hidden_size, res_hidden_size, num_blocks):
    """Deterministic synthetic parameters (PyTorch-style uniform +-1/sqrt(fan_in)).

    Weights are stored already transposed for right-multiplication: x @ W."""
    ks = jax.random.split(key, 8)

    def u(k, shape, fan_in):
        bound = 1.0 / jnp.sqrt(fan_in)
        return jax.random.uniform(k, shape, jnp.float32, -bound, bound)

    we = u(ks[0], (window_size, hidden_size), window_size)
    be = u(ks[1], (1, hidden_size), window_size)
    w1s = u(ks[2], (num_blocks, hidden_size, res_hidden_size), hidden_size)
    b1s = u(ks[3], (num_blocks, 1, res_hidden_size), hidden_size)
    w2s = u(ks[4], (num_blocks, res_hidden_size, hidden_size), res_hidden_size)
    b2s = u(ks[5], (num_blocks, 1, hidden_size), res_hidden_size)
    wd = u(ks[6], (hidden_size, output_size), hidden_size)
    bd = u(ks[7], (1, output_size), hidden_size)
    return we, be, w1s, b1s, w2s, b2s, wd, bd


def smoothnet_ref(x, params):
    """Pure-JAX f32 reference for verification."""
    we, be, w1s, b1s, w2s, b2s, wd, bd = params
    N, C, T = x.shape
    h = x.reshape(N * C, T).astype(jnp.float32)
    h = _lrelu(h @ we + be, 0.1)
    for blk in range(w1s.shape[0]):
        t = _lrelu(h @ w1s[blk] + b1s[blk], 0.2)
        t = _lrelu(t @ w2s[blk] + b2s[blk], 0.2)
        h = h + t
    y = h @ wd + bd
    return y.reshape(N, C, -1)


if __name__ == "__main__":
    # Small shapes: N=2 sequences, C=48 pose dims (16 kpts x 3), window/T=16,
    # output=16, hidden=256, res_hidden=128 (lane-dense weight dims), 3 blocks.
    N, C = 2, 48
    window_size = 16
    output_size = 16
    hidden_size = 256
    res_hidden_size = 128
    num_blocks = 3

    key = jax.random.PRNGKey(0)
    kx, kp = jax.random.split(key)
    x = jax.random.normal(kx, (N, C, window_size), jnp.float32)
    params = init_params(kp, window_size, output_size, hidden_size,
                         res_hidden_size, num_blocks)

    # One-time weight prep (bf16 cast + decoder lane padding), reused below.
    prepared = prepare_params(params)
    ref = smoothnet_ref(x, params)

    # Production path: jitted, auto activation dtype (bf16 on v6e/v7x, f32 on
    # v5e), large row tiles clamped to M and split into >=2 grid steps.
    fwd = jax.jit(functools.partial(smoothnet_forward, output_size=output_size))
    out = jax.block_until_ready(fwd(x, prepared))
    assert out.shape == (N, C, output_size)
    # bf16 MXU operands / bf16 writeback (f32 accumulation) -> loose tolerance.
    assert jnp.allclose(out, ref, atol=5e-2, rtol=5e-2), "mismatch (default path)"

    # Small-tile run: exercises a multi-step grid with a zero-padded last
    # tile and the f32-activation (v5e) path.
    out2 = jax.block_until_ready(
        smoothnet_forward(x, prepared, output_size, tile_rows=40,
                          act_dtype=jnp.float32))
    assert out2.shape == (N, C, output_size)
    assert jnp.allclose(out2, ref, atol=5e-2, rtol=5e-2), "mismatch (small-tile path)"

    print("KERNEL_OK")
</pallas_src>

<mosaic_0001>
module attributes {stable_mosaic.version = 11 : i64} {
  func.func @smoothnet_kernel(%arg0: i32, %arg1: memref<48x16xf32, #tpu.memory_space<vmem>>, %arg2: memref<16x256xbf16, #tpu.memory_space<vmem>>, %arg3: memref<1x256xf32, #tpu.memory_space<vmem>>, %arg4: memref<3x256x128xbf16, #tpu.memory_space<vmem>>, %arg5: memref<3x1x128xf32, #tpu.memory_space<vmem>>, %arg6: memref<3x128x256xbf16, #tpu.memory_space<vmem>>, %arg7: memref<3x1x256xf32, #tpu.memory_space<vmem>>, %arg8: memref<256x128xbf16, #tpu.memory_space<vmem>>, %arg9: memref<1x128xf32, #tpu.memory_space<vmem>>, %arg10: memref<48x128xbf16, #tpu.memory_space<vmem>>) attributes {dimension_semantics = [#tpu.dimension_semantics<parallel>], iteration_bounds = array<i64: 2>, scalar_prefetch = 0 : i64, scratch_operands = 0 : i64, tpu.core_type = #tpu.core_type<tc>, window_params = [{transform_indices = @transform_0, window_bounds = array<i64: 48, 16>}, {pipeline_mode = #tpu.pipeline_mode<synchronous>, transform_indices = @transform_1, window_bounds = array<i64: 16, 256>}, {pipeline_mode = #tpu.pipeline_mode<synchronous>, transform_indices = @transform_2, window_bounds = array<i64: 1, 256>}, {pipeline_mode = #tpu.pipeline_mode<synchronous>, transform_indices = @transform_3, window_bounds = array<i64: 3, 256, 128>}, {pipeline_mode = #tpu.pipeline_mode<synchronous>, transform_indices = @transform_4, window_bounds = array<i64: 3, 1, 128>}, {pipeline_mode = #tpu.pipeline_mode<synchronous>, transform_indices = @transform_5, window_bounds = array<i64: 3, 128, 256>}, {pipeline_mode = #tpu.pipeline_mode<synchronous>, transform_indices = @transform_6, window_bounds = array<i64: 3, 1, 256>}, {pipeline_mode = #tpu.pipeline_mode<synchronous>, transform_indices = @transform_7, window_bounds = array<i64: 256, 128>}, {pipeline_mode = #tpu.pipeline_mode<synchronous>, transform_indices = @transform_8, window_bounds = array<i64: 1, 128>}, {transform_indices = @transform_9, window_bounds = array<i64: 48, 128>}]} {
    %c0 = arith.constant 0 : index
    %c0_0 = arith.constant 0 : index
    %0 = vector.load %arg1[%c0, %c0_0] : memref<48x16xf32, #tpu.memory_space<vmem>>, vector<48x16xf32>
    %1 = arith.truncf %0 : vector<48x16xf32> to vector<48x16xbf16>
    %c0_1 = arith.constant 0 : index
    %c0_2 = arith.constant 0 : index
    %2 = vector.load %arg2[%c0_1, %c0_2] : memref<16x256xbf16, #tpu.memory_space<vmem>>, vector<16x256xbf16>
    %cst = arith.constant dense<0.000000e+00> : vector<48x256xf32>
    %3 = tpu.matmul %1, %2, %cst {dimension_numbers = #tpu.dot_dimension_numbers<[1], [0], [0], [1], [0, 0, 1, 1], [], []>} : vector<48x16xbf16>, vector<16x256xbf16>, vector<48x256xf32> -> vector<48x256xf32>
    %c0_3 = arith.constant 0 : index
    %c0_4 = arith.constant 0 : index
    %4 = vector.load %arg3[%c0_3, %c0_4] : memref<1x256xf32, #tpu.memory_space<vmem>>, vector<1x256xf32>
    %5 = vector.broadcast %4 : vector<1x256xf32> to vector<48x256xf32>
    %6 = arith.addf %3, %5 : vector<48x256xf32>
    %cst_5 = arith.constant 1.000000e-01 : f32
    %7 = vector.broadcast %cst_5 : f32 to vector<48x256xf32>
    %8 = arith.mulf %7, %6 : vector<48x256xf32>
    %9 = arith.maximumf %6, %8 : vector<48x256xf32>
    %10 = arith.truncf %9 : vector<48x256xf32> to vector<48x256xbf16>
    %c0_6 = arith.constant 0 : index
    %c0_7 = arith.constant 0 : index
    %c0_8 = arith.constant 0 : index
    %11 = vector.load %arg4[%c0_6, %c0_7, %c0_8] : memref<3x256x128xbf16, #tpu.memory_space<vmem>>, vector<1x256x128xbf16>
    %12 = vector.shape_cast %11 : vector<1x256x128xbf16> to vector<256x128xbf16>
    %cst_9 = arith.constant dense<0.000000e+00> : vector<48x128xf32>
    %13 = tpu.matmul %10, %12, %cst_9 {dimension_numbers = #tpu.dot_dimension_numbers<[1], [0], [0], [1], [0, 0, 1, 1], [], []>} : vector<48x256xbf16>, vector<256x128xbf16>, vector<48x128xf32> -> vector<48x128xf32>
    %c0_10 = arith.constant 0 : index
    %c0_11 = arith.constant 0 : index
    %c0_12 = arith.constant 0 : index
    %14 = vector.load %arg5[%c0_10, %c0_11, %c0_12] : memref<3x1x128xf32, #tpu.memory_space<vmem>>, vector<1x1x128xf32>
    %15 = vector.shape_cast %14 : vector<1x1x128xf32> to vector<1x128xf32>
    %16 = vector.broadcast %15 : vector<1x128xf32> to vector<48x128xf32>
    %17 = arith.addf %13, %16 : vector<48x128xf32>
    %cst_13 = arith.constant 2.000000e-01 : f32
    %18 = vector.broadcast %cst_13 : f32 to vector<48x128xf32>
    %19 = arith.mulf %18, %17 : vector<48x128xf32>
    %20 = arith.maximumf %17, %19 : vector<48x128xf32>
    %21 = arith.truncf %20 : vector<48x128xf32> to vector<48x128xbf16>
    %c0_14 = arith.constant 0 : index
    %c0_15 = arith.constant 0 : index
    %c0_16 = arith.constant 0 : index
    %22 = vector.load %arg6[%c0_14, %c0_15, %c0_16] : memref<3x128x256xbf16, #tpu.memory_space<vmem>>, vector<1x128x256xbf16>
    %23 = vector.shape_cast %22 : vector<1x128x256xbf16> to vector<128x256xbf16>
    %cst_17 = arith.constant dense<0.000000e+00> : vector<48x256xf32>
    %24 = tpu.matmul %21, %23, %cst_17 {dimension_numbers = #tpu.dot_dimension_numbers<[1], [0], [0], [1], [0, 0, 1, 1], [], []>} : vector<48x128xbf16>, vector<128x256xbf16>, vector<48x256xf32> -> vector<48x256xf32>
    %c0_18 = arith.constant 0 : index
    %c0_19 = arith.constant 0 : index
    %c0_20 = arith.constant 0 : index
    %25 = vector.load %arg7[%c0_18, %c0_19, %c0_20] : memref<3x1x256xf32, #tpu.memory_space<vmem>>, vector<1x1x256xf32>
    %26 = vector.shape_cast %25 : vector<1x1x256xf32> to vector<1x256xf32>
    %27 = vector.broadcast %26 : vector<1x256xf32> to vector<48x256xf32>
    %28 = arith.addf %24, %27 : vector<48x256xf32>
    %cst_21 = arith.constant 2.000000e-01 : f32
    %29 = vector.broadcast %cst_21 : f32 to vector<48x256xf32>
    %30 = arith.mulf %29, %28 : vector<48x256xf32>
    %31 = arith.maximumf %28, %30 : vector<48x256xf32>
    %32 = arith.addf %9, %31 : vector<48x256xf32>
    %33 = arith.truncf %32 : vector<48x256xf32> to vector<48x256xbf16>
    %c1 = arith.constant 1 : index
    %c0_22 = arith.constant 0 : index
    %c0_23 = arith.constant 0 : index
    %34 = vector.load %arg4[%c1, %c0_22, %c0_23] : memref<3x256x128xbf16, #tpu.memory_space<vmem>>, vector<1x256x128xbf16>
    %35 = vector.shape_cast %34 : vector<1x256x128xbf16> to vector<256x128xbf16>
    %cst_24 = arith.constant dense<0.000000e+00> : vector<48x128xf32>
    %36 = tpu.matmul %33, %35, %cst_24 {dimension_numbers = #tpu.dot_dimension_numbers<[1], [0], [0], [1], [0, 0, 1, 1], [], []>} : vector<48x256xbf16>, vector<256x128xbf16>, vector<48x128xf32> -> vector<48x128xf32>
    %c1_25 = arith.constant 1 : index
    %c0_26 = arith.constant 0 : index
    %c0_27 = arith.constant 0 : index
    %37 = vector.load %arg5[%c1_25, %c0_26, %c0_27] : memref<3x1x128xf32, #tpu.memory_space<vmem>>, vector<1x1x128xf32>
    %38 = vector.shape_cast %37 : vector<1x1x128xf32> to vector<1x128xf32>
    %39 = vector.broadcast %38 : vector<1x128xf32> to vector<48x128xf32>
    %40 = arith.addf %36, %39 : vector<48x128xf32>
    %cst_28 = arith.constant 2.000000e-01 : f32
    %41 = vector.broadcast %cst_28 : f32 to vector<48x128xf32>
    %42 = arith.mulf %41, %40 : vector<48x128xf32>
    %43 = arith.maximumf %40, %42 : vector<48x128xf32>
    %44 = arith.truncf %43 : vector<48x128xf32> to vector<48x128xbf16>
    %c1_29 = arith.constant 1 : index
    %c0_30 = arith.constant 0 : index
    %c0_31 = arith.constant 0 : index
    %45 = vector.load %arg6[%c1_29, %c0_30, %c0_31] : memref<3x128x256xbf16, #tpu.memory_space<vmem>>, vector<1x128x256xbf16>
    %46 = vector.shape_cast %45 : vector<1x128x256xbf16> to vector<128x256xbf16>
    %cst_32 = arith.constant dense<0.000000e+00> : vector<48x256xf32>
    %47 = tpu.matmul %44, %46, %cst_32 {dimension_numbers = #tpu.dot_dimension_numbers<[1], [0], [0], [1], [0, 0, 1, 1], [], []>} : vector<48x128xbf16>, vector<128x256xbf16>, vector<48x256xf32> -> vector<48x256xf32>
    %c1_33 = arith.constant 1 : index
    %c0_34 = arith.constant 0 : index
    %c0_35 = arith.constant 0 : index
    %48 = vector.load %arg7[%c1_33, %c0_34, %c0_35] : memref<3x1x256xf32, #tpu.memory_space<vmem>>, vector<1x1x256xf32>
    %49 = vector.shape_cast %48 : vector<1x1x256xf32> to vector<1x256xf32>
    %50 = vector.broadcast %49 : vector<1x256xf32> to vector<48x256xf32>
    %51 = arith.addf %47, %50 : vector<48x256xf32>
    %cst_36 = arith.constant 2.000000e-01 : f32
    %52 = vector.broadcast %cst_36 : f32 to vector<48x256xf32>
    %53 = arith.mulf %52, %51 : vector<48x256xf32>
    %54 = arith.maximumf %51, %53 : vector<48x256xf32>
    %55 = arith.addf %32, %54 : vector<48x256xf32>
    %56 = arith.truncf %55 : vector<48x256xf32> to vector<48x256xbf16>
    %c2 = arith.constant 2 : index
    %c0_37 = arith.constant 0 : index
    %c0_38 = arith.constant 0 : index
    %57 = vector.load %arg4[%c2, %c0_37, %c0_38] : memref<3x256x128xbf16, #tpu.memory_space<vmem>>, vector<1x256x128xbf16>
    %58 = vector.shape_cast %57 : vector<1x256x128xbf16> to vector<256x128xbf16>
    %cst_39 = arith.constant dense<0.000000e+00> : vector<48x128xf32>
    %59 = tpu.matmul %56, %58, %cst_39 {dimension_numbers = #tpu.dot_dimension_numbers<[1], [0], [0], [1], [0, 0, 1, 1], [], []>} : vector<48x256xbf16>, vector<256x128xbf16>, vector<48x128xf32> -> vector<48x128xf32>
    %c2_40 = arith.constant 2 : index
    %c0_41 = arith.constant 0 : index
    %c0_42 = arith.constant 0 : index
    %60 = vector.load %arg5[%c2_40, %c0_41, %c0_42] : memref<3x1x128xf32, #tpu.memory_space<vmem>>, vector<1x1x128xf32>
    %61 = vector.shape_cast %60 : vector<1x1x128xf32> to vector<1x128xf32>
    %62 = vector.broadcast %61 : vector<1x128xf32> to vector<48x128xf32>
    %63 = arith.addf %59, %62 : vector<48x128xf32>
    %cst_43 = arith.constant 2.000000e-01 : f32
    %64 = vector.broadcast %cst_43 : f32 to vector<48x128xf32>
    %65 = arith.mulf %64, %63 : vector<48x128xf32>
    %66 = arith.maximumf %63, %65 : vector<48x128xf32>
    %67 = arith.truncf %66 : vector<48x128xf32> to vector<48x128xbf16>
    %c2_44 = arith.constant 2 : index
    %c0_45 = arith.constant 0 : index
    %c0_46 = arith.constant 0 : index
    %68 = vector.load %arg6[%c2_44, %c0_45, %c0_46] : memref<3x128x256xbf16, #tpu.memory_space<vmem>>, vector<1x128x256xbf16>
    %69 = vector.shape_cast %68 : vector<1x128x256xbf16> to vector<128x256xbf16>
    %cst_47 = arith.constant dense<0.000000e+00> : vector<48x256xf32>
    %70 = tpu.matmul %67, %69, %cst_47 {dimension_numbers = #tpu.dot_dimension_numbers<[1], [0], [0], [1], [0, 0, 1, 1], [], []>} : vector<48x128xbf16>, vector<128x256xbf16>, vector<48x256xf32> -> vector<48x256xf32>
    %c2_48 = arith.constant 2 : index
    %c0_49 = arith.constant 0 : index
    %c0_50 = arith.constant 0 : index
    %71 = vector.load %arg7[%c2_48, %c0_49, %c0_50] : memref<3x1x256xf32, #tpu.memory_space<vmem>>, vector<1x1x256xf32>
    %72 = vector.shape_cast %71 : vector<1x1x256xf32> to vector<1x256xf32>
    %73 = vector.broadcast %72 : vector<1x256xf32> to vector<48x256xf32>
    %74 = arith.addf %70, %73 : vector<48x256xf32>
    %cst_51 = arith.constant 2.000000e-01 : f32
    %75 = vector.broadcast %cst_51 : f32 to vector<48x256xf32>
    %76 = arith.mulf %75, %74 : vector<48x256xf32>
    %77 = arith.maximumf %74, %76 : vector<48x256xf32>
    %78 = arith.addf %55, %77 : vector<48x256xf32>
    %79 = arith.truncf %78 : vector<48x256xf32> to vector<48x256xbf16>
    %c0_52 = arith.constant 0 : index
    %c0_53 = arith.constant 0 : index
    %80 = vector.load %arg8[%c0_52, %c0_53] : memref<256x128xbf16, #tpu.memory_space<vmem>>, vector<256x128xbf16>
    %cst_54 = arith.constant dense<0.000000e+00> : vector<48x128xf32>
    %81 = tpu.matmul %79, %80, %cst_54 {dimension_numbers = #tpu.dot_dimension_numbers<[1], [0], [0], [1], [0, 0, 1, 1], [], []>} : vector<48x256xbf16>, vector<256x128xbf16>, vector<48x128xf32> -> vector<48x128xf32>
    %c0_55 = arith.constant 0 : index
    %c0_56 = arith.constant 0 : index
    %82 = vector.load %arg9[%c0_55, %c0_56] : memref<1x128xf32, #tpu.memory_space<vmem>>, vector<1x128xf32>
    %83 = vector.broadcast %82 : vector<1x128xf32> to vector<48x128xf32>
    %84 = arith.addf %81, %83 : vector<48x128xf32>
    %85 = arith.truncf %84 : vector<48x128xf32> to vector<48x128xbf16>
    %c0_57 = arith.constant 0 : index
    %c0_58 = arith.constant 0 : index
    %86 = vector.load %arg10[%c0_57, %c0_58] : memref<48x128xbf16, #tpu.memory_space<vmem>>, vector<48x128xbf16>
    tpu.vector_store %arg10[%c0_57, %c0_58], %85 {strides = array<i32>} : memref<48x128xbf16, #tpu.memory_space<vmem>>, vector<48x128xbf16>,
    return
  }
  func.func @transform_0(%arg0: i32) -> (i32, i32) {
    %c0_i32 = arith.constant 0 : i32
    %c0_i32_0 = arith.constant 0 : i32
    return %arg0, %c0_i32 : i32, i32
  }
  func.func @transform_1(%arg0: i32) -> (i32, i32) {
    %c0_i32 = arith.constant 0 : i32
    %c0_i32_0 = arith.constant 0 : i32
    %c0_i32_1 = arith.constant 0 : i32
    return %c0_i32, %c0_i32_0 : i32, i32
  }
  func.func @transform_2(%arg0: i32) -> (i32, i32) {
    %c0_i32 = arith.constant 0 : i32
    %c0_i32_0 = arith.constant 0 : i32
    %c0_i32_1 = arith.constant 0 : i32
    return %c0_i32, %c0_i32_0 : i32, i32
  }
  func.func @transform_3(%arg0: i32) -> (i32, i32, i32) {
    %c0_i32 = arith.constant 0 : i32
    %c0_i32_0 = arith.constant 0 : i32
    %c0_i32_1 = arith.constant 0 : i32
    %c0_i32_2 = arith.constant 0 : i32
    return %c0_i32, %c0_i32_0, %c0_i32_1 : i32, i32, i32
  }
  func.func @transform_4(%arg0: i32) -> (i32, i32, i32) {
    %c0_i32 = arith.constant 0 : i32
    %c0_i32_0 = arith.constant 0 : i32
    %c0_i32_1 = arith.constant 0 : i32
    %c0_i32_2 = arith.constant 0 : i32
    return %c0_i32, %c0_i32_0, %c0_i32_1 : i32, i32, i32
  }
  func.func @transform_5(%arg0: i32) -> (i32, i32, i32) {
    %c0_i32 = arith.constant 0 : i32
    %c0_i32_0 = arith.constant 0 : i32
    %c0_i32_1 = arith.constant 0 : i32
    %c0_i32_2 = arith.constant 0 : i32
    return %c0_i32, %c0_i32_0, %c0_i32_1 : i32, i32, i32
  }
  func.func @transform_6(%arg0: i32) -> (i32, i32, i32) {
    %c0_i32 = arith.constant 0 : i32
    %c0_i32_0 = arith.constant 0 : i32
    %c0_i32_1 = arith.constant 0 : i32
    %c0_i32_2 = arith.constant 0 : i32
    return %c0_i32, %c0_i32_0, %c0_i32_1 : i32, i32, i32
  }
  func.func @transform_7(%arg0: i32) -> (i32, i32) {
    %c0_i32 = arith.constant 0 : i32
    %c0_i32_0 = arith.constant 0 : i32
    %c0_i32_1 = arith.constant 0 : i32
    return %c0_i32, %c0_i32_0 : i32, i32
  }
  func.func @transform_8(%arg0: i32) -> (i32, i32) {
    %c0_i32 = arith.constant 0 : i32
    %c0_i32_0 = arith.constant 0 : i32
    %c0_i32_1 = arith.constant 0 : i32
    return %c0_i32, %c0_i32_0 : i32, i32
  }
  func.func @transform_9(%arg0: i32) -> (i32, i32) {
    %c0_i32 = arith.constant 0 : i32
    %c0_i32_0 = arith.constant 0 : i32
    return %arg0, %c0_i32 : i32, i32
  }
}

</mosaic_0001>

<llo_original>
// kernel: smoothnet_forward.1
$region0: #{smoothnet_forward.1}
  #allocation0 [shape = 'u32[]', space=smem, size = 0x4, offset = 0x4, fixed_abs, tag = 'smem constant byte address 0x4 - core index']
  #allocation1 [shape = 'u32[72,128]{1,0:T(1,128)}', space=vmem, size = 0x9000, scoped, tag = 'internal scratch']
  %s0 = inlined_call_operand.vmem [shape: f32[96,16], index: 0, kind: input, shape index: {}]
  %s1 = inlined_call_operand.hbm [shape: bf16[16,256], index: 1, kind: input, shape index: {}]
  %s2 = inlined_call_operand.hbm [shape: f32[1,256], index: 2, kind: input, shape index: {}]
  %s3 = inlined_call_operand.hbm [shape: bf16[3,256,128], index: 3, kind: input, shape index: {}]
  %s4 = inlined_call_operand.hbm [shape: f32[3,1,128], index: 4, kind: input, shape index: {}]
  %s5 = inlined_call_operand.hbm [shape: bf16[3,128,256], index: 5, kind: input, shape index: {}]
  %s6 = inlined_call_operand.vmem [shape: f32[3,1,256], index: 6, kind: input, shape index: {}]
  %s7 = inlined_call_operand.vmem [shape: bf16[256,128], index: 7, kind: input, shape index: {}]
  %s8 = inlined_call_operand.vmem [shape: f32[1,128], index: 8, kind: input, shape index: {}]
  %s9 = inlined_call_operand.vmem [shape: bf16[96,128], index: 9, kind: output, shape index: {}]
  %s10 = sld [smem:[#allocation0]]
  $region89: #{smoothnet_forward.1} parent=0
    _
  %s12 = ssub.s32 1, %s10
  %s13 = scalar_select 0, %s12, %s10
  $region1: #{smoothnet_forward.1} parent=0
    #allocation2 [shape = 'u8[8192]{0}', space=vmem, size = 0x2000, scoped, tag = 'input window, operand 1, single buffered']
    #allocation3 [shape = 's32[2]{0}', space=sflag, size = 0x8, scoped, tag = 'scoped memory for smoothnet_forward.1']
    #allocation4 [shape = 'u8[1024]{0}', space=vmem, size = 0x400, scoped, tag = 'input window, operand 2, single buffered']
    #allocation5 [shape = 's32[1]{0}', space=sflag, size = 0x4, scoped, tag = 'scoped memory for smoothnet_forward.1']
    #allocation6 [shape = 'u8[196608]{0}', space=vmem, size = 0x30000, scoped, tag = 'input window, operand 3, single buffered']
    #allocation7 [shape = 'u8[1536]{0}', space=vmem, size = 0x800, scoped, tag = 'input window, operand 4, single buffered']
    #allocation8 [shape = 's32[1]{0}', space=sflag, size = 0x4, scoped, tag = 'scoped memory for smoothnet_forward.1']
    #allocation9 [shape = 'u8[196608]{0}', space=vmem, size = 0x30000, scoped, tag = 'input window, operand 5, single buffered']
    %14 = vsyncpa [#allocation3], 0
    %15 = vsyncpa [#allocation5], 0
    %16 = vsyncpa [#allocation8], 0
    loop: start=0, step=1, limit=4
    $region2: #{smoothnet_forward.1} parent=1 // loop_pre_header
      _
    $region3: #{smoothnet_forward.1} parent=1 // loop_header
      %s18 = sphi 0, %s22
      %p19 = scmp.ge.s32.totalorder %s18, 4
      %s28 = sphi 0, %s30
      %s31 = sphi 0, %s28
      %s32 = sphi 0, %s31
      %s48 = sphi 0, %s32
      %s52 = sphi 0, %s52
      %s54 = sphi 0, %s52
      %s55 = sphi 0, %s54
      %s69 = sphi 0, %s55
      %s73 = sphi 0, %s73
      %s75 = sphi 0, %s73
      %s76 = sphi 0, %s75
      %s90 = sphi 0, %s76
      %s94 = sphi 0, %s94
      %s96 = sphi 0, %s94
      %s97 = sphi 0, %s96
      %s111 = sphi 0, %s97
      %s115 = sphi 0, %s115
      %s117 = sphi 0, %s115
      %s118 = sphi 0, %s117
      %s132 = sphi 0, %s118
      %s136 = sphi 0, %s136
      %s138 = sphi 0, %s136
      %s139 = sphi 0, %s138
      %s153 = sphi 0, %s139
      %s157 = sphi 0, %s157
      %s159 = sphi 0, %s157
      %s160 = sphi 0, %s159
      %s174 = sphi 0, %s160
      %s178 = sphi 0, %s178
      %s180 = sphi 0, %s178
      %s181 = sphi 0, %s180
      %s195 = sphi 0, %s181
      %s199 = sphi 0, %s199
      %s201 = sphi 0, %s199
      %s202 = sphi 0, %s201
      %s216 = sphi 0, %s202
      %s222 = sphi 0, %s224
      %s225 = sphi 0, %s222
      %s226 = sphi 0, %s225
      %s242 = sphi 0, %s226
    $region4: #{smoothnet_forward.1} parent=1 // loop_header_branch
      %21 = sbr.rel (%p19) target = $region8
    $region5: #{smoothnet_forward.1} parent=1 // loop_body
      %s23 = ssub.s32 %s18, 1
      %s24 = ssub.s32 %s18, 2
      %s25 = sadd.s32 %s18, 1
      %s26 = ssub.s32 %s18, %s25
      %p27 = scmp.eq.s32.totalorder %s26, 0
      %s29 = sadd.s32 %s28, 1
      %s30 = scalar_select %p27, %s28, %s29
      %p33 = pneg %p27
      %p34 = scmp.eq.s32.totalorder %s18, 1
      %p35 = por %p33, %p34
      %p36 = scmp.ne.s32.totalorder %s28, %s31
      %p37 = scmp.eq.s32.totalorder %s18, 0
      %p38 = por %p36, %p37
      %p39 = scmp.ne.s32.totalorder %s28, %s31
      %p40 = scmp.eq.s32.totalorder %s23, 1
      %p41 = por %p39, %p40
      %p42 = scmp.ne.s32.totalorder %s31, %s32
      %p43 = scmp.eq.s32.totalorder %s23, 0
      %p44 = por %p42, %p43
      %p45 = scmp.ne.s32.totalorder %s31, %s32
      %p46 = scmp.eq.s32.totalorder %s24, 1
      %p47 = por %p45, %p46
      %p49 = scmp.ne.s32.totalorder %s32, %s48
      %p50 = scmp.eq.s32.totalorder %s24, 0
      %p51 = por %p49, %p50
      %s53 = sadd.s32 %s52, 1
      %p56 = scmp.eq.s32.totalorder %s18, 1
      %p57 = scmp.ne.s32.totalorder %s52, %s54
      %p58 = scmp.eq.s32.totalorder %s18, 0
      %p59 = por %p57, %p58
      %p60 = scmp.ne.s32.totalorder %s52, %s54
      %p61 = scmp.eq.s32.totalorder %s23, 1
      %p62 = por %p60, %p61
      %p63 = scmp.ne.s32.totalorder %s54, %s55
      %p64 = scmp.eq.s32.totalorder %s23, 0
      %p65 = por %p63, %p64
      %p66 = scmp.ne.s32.totalorder %s54, %s55
      %p67 = scmp.eq.s32.totalorder %s24, 1
      %p68 = por %p66, %p67
      %p70 = scmp.ne.s32.totalorder %s55, %s69
      %p71 = scmp.eq.s32.totalorder %s24, 0
      %p72 = por %p70, %p71
      %s74 = sadd.s32 %s73, 1
      %p77 = scmp.eq.s32.totalorder %s18, 1
      %p78 = scmp.ne.s32.totalorder %s73, %s75
      %p79 = scmp.eq.s32.totalorder %s18, 0
      %p80 = por %p78, %p79
      %p81 = scmp.ne.s32.totalorder %s73, %s75
      %p82 = scmp.eq.s32.totalorder %s23, 1
      %p83 = por %p81, %p82
      %p84 = scmp.ne.s32.totalorder %s75, %s76
      %p85 = scmp.eq.s32.totalorder %s23, 0
      %p86 = por %p84, %p85
      %p87 = scmp.ne.s32.totalorder %s75, %s76
      %p88 = scmp.eq.s32.totalorder %s24, 1
      %p89 = por %p87, %p88
      %p91 = scmp.ne.s32.totalorder %s76, %s90
      %p92 = scmp.eq.s32.totalorder %s24, 0
      %p93 = por %p91, %p92
      %s95 = sadd.s32 %s94, 1
      %p98 = scmp.eq.s32.totalorder %s18, 1
      %p99 = scmp.ne.s32.totalorder %s94, %s96
      %p100 = scmp.eq.s32.totalorder %s18, 0
      %p101 = por %p99, %p100
      %p102 = scmp.ne.s32.totalorder %s94, %s96
      %p103 = scmp.eq.s32.totalorder %s23, 1
      %p104 = por %p102, %p103
      %p105 = scmp.ne.s32.totalorder %s96, %s97
      %p106 = scmp.eq.s32.totalorder %s23, 0
      %p107 = por %p105, %p106
      %p108 = scmp.ne.s32.totalorder %s96, %s97
      %p109 = scmp.eq.s32.totalorder %s24, 1
      %p110 = por %p108, %p109
      %p112 = scmp.ne.s32.totalorder %s97, %s111
      %p113 = scmp.eq.s32.totalorder %s24, 0
      %p114 = por %p112, %p113
      %s116 = sadd.s32 %s115, 1
      %p119 = scmp.eq.s32.totalorder %s18, 1
      %p120 = scmp.ne.s32.totalorder %s115, %s117
      %p121 = scmp.eq.s32.totalorder %s18, 0
      %p122 = por %p120, %p121
      %p123 = scmp.ne.s32.totalorder %s115, %s117
      %p124 = scmp.eq.s32.totalorder %s23, 1
      %p125 = por %p123, %p124
      %p126 = scmp.ne.s32.totalorder %s117, %s118
      %p127 = scmp.eq.s32.totalorder %s23, 0
      %p128 = por %p126, %p127
      %p129 = scmp.ne.s32.totalorder %s117, %s118
      %p130 = scmp.eq.s32.totalorder %s24, 1
      %p131 = por %p129, %p130
      %p133 = scmp.ne.s32.totalorder %s118, %s132
      %p134 = scmp.eq.s32.totalorder %s24, 0
      %p135 = por %p133, %p134
      %s137 = sadd.s32 %s136, 1
      %p140 = scmp.eq.s32.totalorder %s18, 1
      %p141 = scmp.ne.s32.totalorder %s136, %s138
      %p142 = scmp.eq.s32.totalorder %s18, 0
      %p143 = por %p141, %p142
      %p144 = scmp.ne.s32.totalorder %s136, %s138
      %p145 = scmp.eq.s32.totalorder %s23, 1
      %p146 = por %p144, %p145
      %p147 = scmp.ne.s32.totalorder %s138, %s139
      %p148 = scmp.eq.s32.totalorder %s23, 0
      %p149 = por %p147, %p148
      %p150 = scmp.ne.s32.totalorder %s138, %s139
      %p151 = scmp.eq.s32.totalorder %s24, 1
      %p152 = por %p150, %p151
      %p154 = scmp.ne.s32.totalorder %s139, %s153
      %p155 = scmp.eq.s32.totalorder %s24, 0
      %p156 = por %p154, %p155
      %s158 = sadd.s32 %s157, 1
      %p161 = scmp.eq.s32.totalorder %s18, 1
      %p162 = scmp.ne.s32.totalorder %s157, %s159
      %p163 = scmp.eq.s32.totalorder %s18, 0
      %p164 = por %p162, %p163
      %p165 = scmp.ne.s32.totalorder %s157, %s159
      %p166 = scmp.eq.s32.totalorder %s23, 1
      %p167 = por %p165, %p166
      %p168 = scmp.ne.s32.totalorder %s159, %s160
      %p169 = scmp.eq.s32.totalorder %s23, 0
      %p170 = por %p168, %p169
      %p171 = scmp.ne.s32.totalorder %s159, %s160
      %p172 = scmp.eq.s32.totalorder %s24, 1
      %p173 = por %p171, %p172
      %p175 = scmp.ne.s32.totalorder %s160, %s174
      %p176 = scmp.eq.s32.totalorder %s24, 0
      %p177 = por %p175, %p176
      %s179 = sadd.s32 %s178, 1
      %p182 = scmp.eq.s32.totalorder %s18, 1
      %p183 = scmp.ne.s32.totalorder %s178, %s180
      %p184 = scmp.eq.s32.totalorder %s18, 0
      %p185 = por %p183, %p184
      %p186 = scmp.ne.s32.totalorder %s178, %s180
      %p187 = scmp.eq.s32.totalorder %s23, 1
      %p188 = por %p186, %p187
      %p189 = scmp.ne.s32.totalorder %s180, %s181
      %p190 = scmp.eq.s32.totalorder %s23, 0
      %p191 = por %p189, %p190
      %p192 = scmp.ne.s32.totalorder %s180, %s181
      %p193 = scmp.eq.s32.totalorder %s24, 1
      %p194 = por %p192, %p193
      %p196 = scmp.ne.s32.totalorder %s181, %s195
      %p197 = scmp.eq.s32.totalorder %s24, 0
      %p198 = por %p196, %p197
      %s200 = sadd.s32 %s199, 1
      %p203 = scmp.eq.s32.totalorder %s18, 1
      %p204 = scmp.ne.s32.totalorder %s199, %s201
      %p205 = scmp.eq.s32.totalorder %s18, 0
      %p206 = por %p204, %p205
      %p207 = scmp.ne.s32.totalorder %s199, %s201
      %p208 = scmp.eq.s32.totalorder %s23, 1
      %p209 = por %p207, %p208
      %p210 = scmp.ne.s32.totalorder %s201, %s202
      %p211 = scmp.eq.s32.totalorder %s23, 0
      %p212 = por %p210, %p211
      %p213 = scmp.ne.s32.totalorder %s201, %s202
      %p214 = scmp.eq.s32.totalorder %s24, 1
      %p215 = por %p213, %p214
      %p217 = scmp.ne.s32.totalorder %s202, %s216
      %p218 = scmp.eq.s32.totalorder %s24, 0
      %p219 = por %p217, %p218
      %s220 = ssub.s32 %s18, %s25
      %p221 = scmp.eq.s32.totalorder %s220, 0
      %s223 = sadd.s32 %s222, 1
      %s224 = scalar_select %p221, %s222, %s223
      %p227 = pneg %p221
      %p228 = scmp.eq.s32.totalorder %s18, 1
      %p229 = por %p227, %p228
      %p230 = scmp.ne.s32.totalorder %s222, %s225
      %p231 = scmp.eq.s32.totalorder %s18, 0
      %p232 = por %p230, %p231
      %p233 = scmp.ne.s32.totalorder %s222, %s225
      %p234 = scmp.eq.s32.totalorder %s23, 1
      %p235 = por %p233, %p234
      %p236 = scmp.ne.s32.totalorder %s225, %s226
      %p237 = scmp.eq.s32.totalorder %s23, 0
      %p238 = por %p236, %p237
      %p239 = scmp.ne.s32.totalorder %s225, %s226
      %p240 = scmp.eq.s32.totalorder %s24, 1
      %p241 = por %p239, %p240
      %p243 = scmp.ne.s32.totalorder %s226, %s242
      %p244 = scmp.eq.s32.totalorder %s24, 0
      %p245 = por %p243, %p244
      %p246 = scmp.le.s32.totalorder 1, %s18
      %p247 = scmp.lt.s32.totalorder %s18, 3
      %p248 = pnand %p246, %p247
      %p249 = pneg %p248
      // Predicated region
      $region9: #{smoothnet_forward.1} parent=5 // pred_check
        _
      $region10: #{smoothnet_forward.1} parent=5 // pred_check_branch
        %251 = sbr.rel (%p248) target = $region12
      $region11: #{smoothnet_forward.1} parent=5 // pred_region
        %s252 = ssub.s32 %s18, 1
        // Predicated region
        $region13: #{smoothnet_forward.1} parent=11 // pred_check
          %p253 = pneg %p65
        $region14: #{smoothnet_forward.1} parent=11 // pred_check_branch
          %255 = sbr.rel (%p253) target = $region16
        $region15: #{smoothnet_forward.1} parent=11 // pred_region
          %257 = vsyncadd [#allocation3], 0
          %s258 = sshll.u32 %s1, 4
          %s259 = int_to_ptr.hbm [resolvable:$true] %s258
          %s260 = sshll.u32 [#allocation2], 4
          %s261 = int_to_ptr.vmem [resolvable:$true] %s260
          %266 = dma.hbm_to_vmem [thread:$0]  %s259, 256, %s261, [#allocation3], 128, 128, 8
        $region16: #{smoothnet_forward.1} parent=11 // pred_fallthru
          _
        // Predicated region
        $region17: #{smoothnet_forward.1} parent=11 // pred_check
          %p267 = pneg %p86
        $region18: #{smoothnet_forward.1} parent=11 // pred_check_branch
          %269 = sbr.rel (%p267) target = $region20
        $region19: #{smoothnet_forward.1} parent=11 // pred_region
          %271 = vsyncadd [#allocation5], 0
          %s273 = sshll.u32 %s2, 4
          %s274 = int_to_ptr.hbm [resolvable:$true] %s273
          %s275 = sshll.u32 [#allocation4], 4
          %s276 = int_to_ptr.vmem [resolvable:$true] %s275
          %278 = dma.hbm_to_vmem [thread:$0]  %s274, 32, %s276, [#allocation5]
        $region20: #{smoothnet_forward.1} parent=11 // pred_fallthru
          _
        // Predicated region
        $region21: #{smoothnet_forward.1} parent=11 // pred_check
          %p279 = pneg %p107
        $region22: #{smoothnet_forward.1} parent=11 // pred_check_branch
          %281 = sbr.rel (%p279) target = $region24
        $region23: #{smoothnet_forward.1} parent=11 // pred_region
          %283 = vsyncadd [#allocation5], 0
          %s284 = sshll.u32 %s3, 4
          %s285 = int_to_ptr.hbm [resolvable:$true] %s284
          %s286 = sshll.u32 [#allocation6], 4
          %s287 = int_to_ptr.vmem [resolvable:$true] %s286
          %292 = dma.hbm_to_vmem [thread:$0]  %s285, 6144, %s287, [#allocation5], 64, 64, 4
        $region24: #{smoothnet_forward.1} parent=11 // pred_fallthru
          _
        // Predicated region
        $region25: #{smoothnet_forward.1} parent=11 // pred_check
          %p293 = pneg %p128
        $region26: #{smoothnet_forward.1} parent=11 // pred_check_branch
          %295 = sbr.rel (%p293) target = $region28
        $region27: #{smoothnet_forward.1} parent=11 // pred_region
          %297 = vsyncadd [#allocation8], 0
          %s298 = sshll.u32 %s4, 4
          %s299 = int_to_ptr.hbm [resolvable:$true] %s298
          %s300 = sshll.u32 [#allocation7], 4
          %s301 = int_to_ptr.vmem [resolvable:$true] %s300
          %306 = dma.hbm_to_vmem [thread:$0]  %s299, 48, %s301, [#allocation8], 16, 16, 1
        $region28: #{smoothnet_forward.1} parent=11 // pred_fallthru
          _
        // Predicated region
        $region29: #{smoothnet_forward.1} parent=11 // pred_check
          %p307 = pneg %p149
        $region30: #{smoothnet_forward.1} parent=11 // pred_check_branch
          %309 = sbr.rel (%p307) target = $region32
        $region31: #{smoothnet_forward.1} parent=11 // pred_region
          %311 = vsyncadd [#allocation8], 0
          %s312 = sshll.u32 %s5, 4
          %s313 = int_to_ptr.hbm [resolvable:$true] %s312
          %s314 = sshll.u32 [#allocation9], 4
          %s315 = int_to_ptr.vmem [resolvable:$true] %s314
          %320 = dma.hbm_to_vmem [thread:$0]  %s313, 6144, %s315, [#allocation8], 128, 128, 8
        $region32: #{smoothnet_forward.1} parent=11 // pred_fallthru
          _
        // Predicated region
        $region33: #{smoothnet_forward.1} parent=11 // pred_check
          %p321 = pneg %p170
        $region34: #{smoothnet_forward.1} parent=11 // pred_check_branch
          %323 = sbr.rel (%p321) target = $region36
        $region35: #{smoothnet_forward.1} parent=11 // pred_region
          _
        $region36: #{smoothnet_forward.1} parent=11 // pred_fallthru
          _
        // Predicated region
        $region37: #{smoothnet_forward.1} parent=11 // pred_check
          %p324 = pneg %p191
        $region38: #{smoothnet_forward.1} parent=11 // pred_check_branch
          %326 = sbr.rel (%p324) target = $region40
        $region39: #{smoothnet_forward.1} parent=11 // pred_region
          _
        $region40: #{smoothnet_forward.1} parent=11 // pred_fallthru
          _
        // Predicated region
        $region41: #{smoothnet_forward.1} parent=11 // pred_check
          %p327 = pneg %p212
        $region42: #{smoothnet_forward.1} parent=11 // pred_check_branch
          %329 = sbr.rel (%p327) target = $region44
        $region43: #{smoothnet_forward.1} parent=11 // pred_region
          _
        $region44: #{smoothnet_forward.1} parent=11 // pred_fallthru
          _
      $region12: #{smoothnet_forward.1} parent=5 // pred_fallthru
        _
      %p330 = scmp.lt.s32.totalorder %s18, 2
      // Predicated region
      $region45: #{smoothnet_forward.1} parent=5 // pred_check
        %p331 = pneg %p330
      $region46: #{smoothnet_forward.1} parent=5 // pred_check_branch
        %333 = sbr.rel (%p331) target = $region48
      $region47: #{smoothnet_forward.1} parent=5 // pred_region
        // Predicated region
        $region49: #{smoothnet_forward.1} parent=47 // pred_check
          %p334 = pneg %p38
        $region50: #{smoothnet_forward.1} parent=47 // pred_check_branch
          %336 = sbr.rel (%p334) target = $region52
        $region51: #{smoothnet_forward.1} parent=47 // pred_region
          %s337 = smul.u32 6, %s18
          %p338 = scmp.lt.s32.totalorder %s337, 11
          %s339 = scalar_select %p338, %s337, 11
          %s340 = smul.addr %s339, 8
          %s341 = scalar_lea.vmem %s0, %s340
          %s342 = smul.u32 6, %s18
        $region52: #{smoothnet_forward.1} parent=47 // pred_fallthru
          _
      $region48: #{smoothnet_forward.1} parent=5 // pred_fallthru
        _
      %p343 = scmp.le.s32.totalorder 1, %s18
      %p344 = scmp.lt.s32.totalorder %s18, 3
      %p345 = pnand %p343, %p344
      %p346 = pneg %p345
      // Predicated region
      $region53: #{smoothnet_forward.1} parent=5 // pred_check
        _
      $region54: #{smoothnet_forward.1} parent=5 // pred_check_branch
        %348 = sbr.rel (%p345) target = $region56
      $region55: #{smoothnet_forward.1} parent=5 // pred_region
        %s349 = ssub.s32 %s18, 1
        // Predicated region
        $region57: #{smoothnet_forward.1} parent=55 // pred_check
          %p350 = pneg %p65
        $region58: #{smoothnet_forward.1} parent=55 // pred_check_branch
          %352 = sbr.rel (%p350) target = $region60
        $region59: #{smoothnet_forward.1} parent=55 // pred_region
          %354 = dma.done [#allocation3], 256
        $region60: #{smoothnet_forward.1} parent=55 // pred_fallthru
          _
        // Predicated region
        $region61: #{smoothnet_forward.1} parent=55 // pred_check
          %p355 = pneg %p86
        $region62: #{smoothnet_forward.1} parent=55 // pred_check_branch
          %357 = sbr.rel (%p355) target = $region64
        $region63: #{smoothnet_forward.1} parent=55 // pred_region
          %359 = dma.done [#allocation5], 32
        $region64: #{smoothnet_forward.1} parent=55 // pred_fallthru
          _
        // Predicated region
        $region65: #{smoothnet_forward.1} parent=55 // pred_check
          %p360 = pneg %p107
        $region66: #{smoothnet_forward.1} parent=55 // pred_check_branch
          %362 = sbr.rel (%p360) target = $region68
        $region67: #{smoothnet_forward.1} parent=55 // pred_region
          %364 = dma.done [#allocation5], 6144
        $region68: #{smoothnet_forward.1} parent=55 // pred_fallthru
          _
        // Predicated region
        $region69: #{smoothnet_forward.1} parent=55 // pred_check
          %p365 = pneg %p128
        $region70: #{smoothnet_forward.1} parent=55 // pred_check_branch
          %367 = sbr.rel (%p365) target = $region72
        $region71: #{smoothnet_forward.1} parent=55 // pred_region
          %369 = dma.done [#allocation8], 48
        $region72: #{smoothnet_forward.1} parent=55 // pred_fallthru
          _
        // Predicated region
        $region73: #{smoothnet_forward.1} parent=55 // pred_check
          %p370 = pneg %p149
        $region74: #{smoothnet_forward.1} parent=55 // pred_check_branch
          %372 = sbr.rel (%p370) target = $region76
        $region75: #{smoothnet_forward.1} parent=55 // pred_region
          %374 = dma.done [#allocation8], 6144
        $region76: #{smoothnet_forward.1} parent=55 // pred_fallthru
          _
        %s375 = smul.u32 6, %s23
        %p376 = scmp.lt.s32.totalorder %s375, 11
        %s377 = scalar_select %p376, %s375, 11
        %s378 = smul.addr %s377, 8
        %s379 = scalar_lea.vmem %s0, %s378
        %p380 = pneg %p44
        %p381 = pneg %p41
        %p382 = pneg %p65
        %p383 = pneg %p62
        %p384 = pneg %p86
        %p385 = pneg %p83
        %p386 = pneg %p107
        %p387 = pneg %p104
        %p388 = pneg %p128
        %p389 = pneg %p125
        %p390 = pneg %p149
        %p391 = pneg %p146
        %p392 = pneg %p170
        %p393 = pneg %p167
        %p394 = pneg %p191
        %p395 = pneg %p188
        %p396 = pneg %p212
        %p397 = pneg %p209
        %p398 = pneg %p238
        %p399 = pneg %p235
        %s400 = smul.u32 6, %s23
        %p401 = scmp.lt.s32.totalorder %s400, 11
        %s402 = scalar_select %p401, %s400, 11
        %s403 = smul.addr %s402, 4
        %s404 = scalar_lea.vmem %s9, %s403
        %s405 = smul.u32 6, %s23
        %p406 = scmp.lt.s32.totalorder %s405, 11
        %s407 = scalar_select %p406, %s405, 11
        %s408 = smul.addr %s407, 8
        %s409 = scalar_lea.vmem %s0, %s408
        %s410 = smul.u32 6, %s23
        %s411 = smul.u32 6, %s23
        %p412 = scmp.lt.s32.totalorder %s411, 11
        %s413 = scalar_select %p412, %s411, 11
        %s414 = smul.addr %s413, 4
        %s415 = scalar_lea.vmem %s9, %s414
        %s416 = smul.u32 6, %s23
        %v418 = vld [vmem:[%s409] sm:$0xff]
        %v419 = vld [vmem:[%s409 + $0x8] sm:$0xff]
        %v420 = vld [vmem:[%s409 + $0x10] sm:$0xff]
        %v421 = vld [vmem:[%s409 + $0x18] sm:$0xff]
        %v422 = vld [vmem:[%s409 + $0x20] sm:$0xff]
        %v423 = vld [vmem:[%s409 + $0x28] sm:$0xff]
        %v424 = vpack.c.bf16 %v419, %v418
        %v425 = vpack.c.bf16 %v421, %v420
        %v426 = vpack.c.bf16 %v423, %v422
        %v427 = vld [vmem:[#allocation2] sm:$0xff]
        %v428 = vld [vmem:[#allocation2 + $0x8] sm:$0xff]
        %v429 = vld [vmem:[#allocation4] sm:$0x3]
        %v431 = vperm.slane %v429, 0
        %v432 = vperm.slane %v429, 1
        %v437 = vunpack.c.l.b16 %v427
        %v438 = vunpack.c.h.b16 %v427
        %v439 = vunpack.c.l.b16 %v428
        %v440 = vunpack.c.h.b16 %v428
        %v441 = vpack.c.b16 %v439, %v437
        %v442 = vpack.c.b16 %v440, %v438
        %vm445 = vcmask 130048
        %v447 = vsel %vm445, %v424, 0
        %v450 = vsel %vm445, %v425, 0
        %v453 = vsel %vm445, %v426, 0
        %455 = vmatpush.bf16.msra.mxu0 0
        %456 = vmatpush.bf16.msra.mxu0 0
        %457 = vmatpush.bf16.msra.mxu0 0
        %458 = vmatpush.bf16.msra.mxu0 0
        %459 = vmatpush.bf16.msra.mxu0 0
        %460 = vmatpush.bf16.msra.mxu0 0
        %461 = vmatpush.bf16.msra.mxu0 0
        %462 = vmatpush.bf16.msra.mxu0 %v441
        %463 = vmatmul.bf16.gmra.mxu0 %v447
        %v464 = vpop.f32.mrf.mxu0
        %v465 = vadd.f32 %v431, %v464
        %v466 = vpop.f32.mrf.mxu0
        %v467 = vadd.f32 %v431, %v466
        %468 = vmatmul.bf16.gmra.mxu0 %v450
        %v469 = vpop.f32.mrf.mxu0
        %v470 = vadd.f32 %v431, %v469
        %v471 = vpop.f32.mrf.mxu0
        %v472 = vadd.f32 %v431, %v471
        %473 = vmatmul.bf16.gmra.mxu0 %v453
        %v474 = vpop.f32.mrf.mxu0
        %v475 = vadd.f32 %v431, %v474
        %v476 = vpop.f32.mrf.mxu0
        %v477 = vadd.f32 %v431, %v476
        %478 = vdwg.mxu0
        %479 = vmatpush.bf16.msra.mxu0 0
        %480 = vmatpush.bf16.msra.mxu0 0
        %481 = vmatpush.bf16.msra.mxu0 0
        %482 = vmatpush.bf16.msra.mxu0 0
        %483 = vmatpush.bf16.msra.mxu0 0
        %484 = vmatpush.bf16.msra.mxu0 0
        %485 = vmatpush.bf16.msra.mxu0 0
        %486 = vmatpush.bf16.msra.mxu0 %v442
        %487 = vmatmul.bf16.gmra.mxu0 %v447
        %v488 = vpop.f32.mrf.mxu0
        %v489 = vadd.f32 %v432, %v488
        %v490 = vpop.f32.mrf.mxu0
        %v491 = vadd.f32 %v432, %v490
        %492 = vmatmul.bf16.gmra.mxu0 %v450
        %v493 = vpop.f32.mrf.mxu0
        %v494 = vadd.f32 %v432, %v493
        %v495 = vpop.f32.mrf.mxu0
        %v496 = vadd.f32 %v432, %v495
        %497 = vmatmul.bf16.gmra.mxu0 %v453
        %v498 = vpop.f32.mrf.mxu0
        %v499 = vadd.f32 %v432, %v498
        %v500 = vpop.f32.mrf.mxu0
        %v501 = vadd.f32 %v432, %v500
        %502 = vdwg.mxu0
        %v503 = vmul.f32 %v465, 0.1
        %v504 = vmul.f32 %v489, 0.1
        %v505 = vmul.f32 %v467, 0.1
        %v506 = vmul.f32 %v491, 0.1
        %v507 = vmul.f32 %v470, 0.1
        %v508 = vmul.f32 %v494, 0.1
        %v509 = vmul.f32 %v472, 0.1
        %v510 = vmul.f32 %v496, 0.1
        %v511 = vmul.f32 %v475, 0.1
        %v512 = vmul.f32 %v499, 0.1
        %v513 = vmul.f32 %v477, 0.1
        %v514 = vmul.f32 %v501, 0.1
        %v515 = vmax.f32 %v465, %v503
        %v516 = vmax.f32 %v489, %v504
        %v517 = vmax.f32 %v467, %v505
        %v518 = vmax.f32 %v491, %v506
        %v519 = vmax.f32 %v470, %v507
        %v520 = vmax.f32 %v494, %v508
        %v521 = vmax.f32 %v472, %v509
        %v522 = vmax.f32 %v496, %v510
        %v523 = vmax.f32 %v475, %v511
        %v524 = vmax.f32 %v499, %v512
        %v525 = vmax.f32 %v477, %v513
        %v526 = vmax.f32 %v501, %v514
        %v527 = vpack.c.bf16 %v517, %v515
        %v528 = vpack.c.bf16 %v518, %v516
        %v529 = vpack.c.bf16 %v521, %v519
        %v530 = vpack.c.bf16 %v522, %v520
        %v531 = vpack.c.bf16 %v525, %v523
        %v532 = vpack.c.bf16 %v526, %v524
        %v533 = vld [vmem:[#allocation6] sm:$0xf]
        %v534 = vld [vmem:[#allocation6 + $0x4] sm:$0xf]
        %v535 = vld [vmem:[#allocation6 + $0x8] sm:$0xf]
        %v536 = vld [vmem:[#allocation6 + $0xc] sm:$0xf]
        %v537 = vld [vmem:[#allocation6 + $0x10] sm:$0xf]
        %v538 = vld [vmem:[#allocation6 + $0x14] sm:$0xf]
        %v539 = vld [vmem:[#allocation6 + $0x18] sm:$0xf]
        %v540 = vld [vmem:[#allocation6 + $0x1c] sm:$0xf]
        %v541 = vld [vmem:[#allocation6 + $0x20] sm:$0xf]
        %v542 = vld [vmem:[#allocation6 + $0x24] sm:$0xf]
        %v543 = vld [vmem:[#allocation6 + $0x28] sm:$0xf]
        %v544 = vld [vmem:[#allocation6 + $0x2c] sm:$0xf]
        %v545 = vld [vmem:[#allocation6 + $0x30] sm:$0xf]
        %v546 = vld [vmem:[#allocation6 + $0x34] sm:$0xf]
        %v547 = vld [vmem:[#allocation6 + $0x38] sm:$0xf]
        %v548 = vld [vmem:[#allocation6 + $0x3c] sm:$0xf]
        %v549 = vld [vmem:[#allocation6 + $0x40] sm:$0xf]
        %v550 = vld [vmem:[#allocation6 + $0x44] sm:$0xf]
        %v551 = vld [vmem:[#allocation6 + $0x48] sm:$0xf]
        %v552 = vld [vmem:[#allocation6 + $0x4c] sm:$0xf]
        %v553 = vld [vmem:[#allocation6 + $0x50] sm:$0xf]
        %v554 = vld [vmem:[#allocation6 + $0x54] sm:$0xf]
        %v555 = vld [vmem:[#allocation6 + $0x58] sm:$0xf]
        %v556 = vld [vmem:[#allocation6 + $0x5c] sm:$0xf]
        %v557 = vld [vmem:[#allocation6 + $0x60] sm:$0xf]
        %v558 = vld [vmem:[#allocation6 + $0x64] sm:$0xf]
        %v559 = vld [vmem:[#allocation6 + $0x68] sm:$0xf]
        %v560 = vld [vmem:[#allocation6 + $0x6c] sm:$0xf]
        %v561 = vld [vmem:[#allocation6 + $0x70] sm:$0xf]
        %v562 = vld [vmem:[#allocation6 + $0x74] sm:$0xf]
        %v563 = vld [vmem:[#allocation6 + $0x78] sm:$0xf]
        %v564 = vld [vmem:[#allocation6 + $0x7c] sm:$0xf]
        %v565 = vld [vmem:[#allocation7] sm:$0x1]
        %v567 = vperm.slane %v565, 0
        %v601 = vunpack.c.l.b16 %v533
        %v602 = vunpack.c.l.b16 %v534
        %v603 = vunpack.c.l.b16 %v535
        %v604 = vunpack.c.l.b16 %v536
        %v605 = vunpack.c.l.b16 %v537
        %v606 = vunpack.c.l.b16 %v538
        %v607 = vunpack.c.l.b16 %v539
        %v608 = vunpack.c.l.b16 %v540
        %v609 = vunpack.c.l.b16 %v541
        %v610 = vunpack.c.l.b16 %v542
        %v611 = vunpack.c.l.b16 %v543
        %v612 = vunpack.c.l.b16 %v544
        %v613 = vunpack.c.l.b16 %v545
        %v614 = vunpack.c.l.b16 %v546
        %v615 = vunpack.c.l.b16 %v547
        %v616 = vunpack.c.l.b16 %v548
        %v617 = vunpack.c.l.b16 %v549
        %v618 = vunpack.c.l.b16 %v550
        %v619 = vunpack.c.l.b16 %v551
        %v620 = vunpack.c.l.b16 %v552
        %v621 = vunpack.c.l.b16 %v553
        %v622 = vunpack.c.l.b16 %v554
        %v623 = vunpack.c.l.b16 %v555
        %v624 = vunpack.c.l.b16 %v556
        %v625 = vunpack.c.l.b16 %v557
        %v626 = vunpack.c.l.b16 %v558
        %v627 = vunpack.c.l.b16 %v559
        %v628 = vunpack.c.l.b16 %v560
        %v629 = vunpack.c.l.b16 %v561
        %v630 = vunpack.c.l.b16 %v562
        %v631 = vunpack.c.l.b16 %v563
        %v632 = vunpack.c.l.b16 %v564
        %v633 = vpack.c.b16 %v602, %v601
        %v634 = vpack.c.b16 %v604, %v603
        %v635 = vpack.c.b16 %v606, %v605
        %v636 = vpack.c.b16 %v608, %v607
        %v637 = vpack.c.b16 %v610, %v609
        %v638 = vpack.c.b16 %v612, %v611
        %v639 = vpack.c.b16 %v614, %v613
        %v640 = vpack.c.b16 %v616, %v615
        %v641 = vpack.c.b16 %v618, %v617
        %v642 = vpack.c.b16 %v620, %v619
        %v643 = vpack.c.b16 %v622, %v621
        %v644 = vpack.c.b16 %v624, %v623
        %v645 = vpack.c.b16 %v626, %v625
        %v646 = vpack.c.b16 %v628, %v627
        %v647 = vpack.c.b16 %v630, %v629
        %v648 = vpack.c.b16 %v632, %v631
        %665 = vmatpush.bf16.msra.mxu0 %v640
        %666 = vmatpush.bf16.msra.mxu0 %v639
        %667 = vmatpush.bf16.msra.mxu0 %v638
        %668 = vmatpush.bf16.msra.mxu0 %v637
        %669 = vmatpush.bf16.msra.mxu0 %v636
        %670 = vmatpush.bf16.msra.mxu0 %v635
        %671 = vmatpush.bf16.msra.mxu0 %v634
        %672 = vmatpush.bf16.msra.mxu0 %v633
        %673 = vmatmul.bf16.gmra.mxu0 %v527
        %v674 = vpop.f32.mrf.mxu0
        %v675 = vadd.f32 %v567, %v674
        %v676 = vpop.f32.mrf.mxu0
        %v677 = vadd.f32 %v567, %v676
        %678 = vmatmul.bf16.gmra.mxu0 %v529
        %v679 = vpop.f32.mrf.mxu0
        %v680 = vadd.f32 %v567, %v679
        %v681 = vpop.f32.mrf.mxu0
        %v682 = vadd.f32 %v567, %v681
        %683 = vmatmul.bf16.gmra.mxu0 %v531
        %v684 = vpop.f32.mrf.mxu0
        %v685 = vadd.f32 %v567, %v684
        %v686 = vpop.f32.mrf.mxu0
        %v687 = vadd.f32 %v567, %v686
        %688 = vdwg.mxu0
        %689 = vmatpush.bf16.msra.mxu0 %v648
        %690 = vmatpush.bf16.msra.mxu0 %v647
        %691 = vmatpush.bf16.msra.mxu0 %v646
        %692 = vmatpush.bf16.msra.mxu0 %v645
        %693 = vmatpush.bf16.msra.mxu0 %v644
        %694 = vmatpush.bf16.msra.mxu0 %v643
        %695 = vmatpush.bf16.msra.mxu0 %v642
        %696 = vmatpush.bf16.msra.mxu0 %v641
        %697 = vmatmul.bf16.gmra.mxu0 %v528
        %v698 = vpop.f32.mrf.mxu0
        %v699 = vadd.f32 %v675, %v698
        %v700 = vpop.f32.mrf.mxu0
        %v701 = vadd.f32 %v677, %v700
        %702 = vmatmul.bf16.gmra.mxu0 %v530
        %v703 = vpop.f32.mrf.mxu0
        %v704 = vadd.f32 %v680, %v703
        %v705 = vpop.f32.mrf.mxu0
        %v706 = vadd.f32 %v682, %v705
        %707 = vmatmul.bf16.gmra.mxu0 %v532
        %v708 = vpop.f32.mrf.mxu0
        %v709 = vadd.f32 %v685, %v708
        %v710 = vpop.f32.mrf.mxu0
        %v711 = vadd.f32 %v687, %v710
        %712 = vdwg.mxu0
        %v713 = vmul.f32 %v699, 0.2
        %v714 = vmul.f32 %v701, 0.2
        %v715 = vmul.f32 %v704, 0.2
        %v716 = vmul.f32 %v706, 0.2
        %v717 = vmul.f32 %v709, 0.2
        %v718 = vmul.f32 %v711, 0.2
        %v719 = vmax.f32 %v699, %v713
        %v720 = vmax.f32 %v701, %v714
        %v721 = vmax.f32 %v704, %v715
        %v722 = vmax.f32 %v706, %v716
        %v723 = vmax.f32 %v709, %v717
        %v724 = vmax.f32 %v711, %v718
        %v725 = vpack.c.bf16 %v720, %v719
        %v726 = vpack.c.bf16 %v722, %v721
        %v727 = vpack.c.bf16 %v724, %v723
        %v728 = vld [vmem:[#allocation9] sm:$0xff]
        %v729 = vld [vmem:[#allocation9 + $0x8] sm:$0xff]
        %v730 = vld [vmem:[#allocation9 + $0x10] sm:$0xff]
        %v731 = vld [vmem:[#allocation9 + $0x18] sm:$0xff]
        %v732 = vld [vmem:[#allocation9 + $0x20] sm:$0xff]
        %v733 = vld [vmem:[#allocation9 + $0x28] sm:$0xff]
        %v734 = vld [vmem:[#allocation9 + $0x30] sm:$0xff]
        %v735 = vld [vmem:[#allocation9 + $0x38] sm:$0xff]
        %v736 = vld [vmem:[#allocation9 + $0x40] sm:$0xff]
        %v737 = vld [vmem:[#allocation9 + $0x48] sm:$0xff]
        %v738 = vld [vmem:[#allocation9 + $0x50] sm:$0xff]
        %v739 = vld [vmem:[#allocation9 + $0x58] sm:$0xff]
        %v740 = vld [vmem:[#allocation9 + $0x60] sm:$0xff]
        %v741 = vld [vmem:[#allocation9 + $0x68] sm:$0xff]
        %v742 = vld [vmem:[#allocation9 + $0x70] sm:$0xff]
        %v743 = vld [vmem:[#allocation9 + $0x78] sm:$0xff]
        %v744 = vld [vmem:[%s6] sm:$0x3]
        %v746 = vperm.slane %v744, 0
        %v747 = vperm.slane %v744, 1
        %v766 = vunpack.c.l.b16 %v728
        %v767 = vunpack.c.h.b16 %v728
        %v768 = vunpack.c.l.b16 %v729
        %v769 = vunpack.c.h.b16 %v729
        %v770 = vunpack.c.l.b16 %v730
        %v771 = vunpack.c.h.b16 %v730
        %v772 = vunpack.c.l.b16 %v731
        %v773 = vunpack.c.h.b16 %v731
        %v774 = vunpack.c.l.b16 %v732
        %v775 = vunpack.c.h.b16 %v732
        %v776 = vunpack.c.l.b16 %v733
        %v777 = vunpack.c.h.b16 %v733
        %v778 = vunpack.c.l.b16 %v734
        %v779 = vunpack.c.h.b16 %v734
        %v780 = vunpack.c.l.b16 %v735
        %v781 = vunpack.c.h.b16 %v735
        %v782 = vunpack.c.l.b16 %v736
        %v783 = vunpack.c.h.b16 %v736
        %v784 = vunpack.c.l.b16 %v737
        %v785 = vunpack.c.h.b16 %v737
        %v786 = vunpack.c.l.b16 %v738
        %v787 = vunpack.c.h.b16 %v738
        %v788 = vunpack.c.l.b16 %v739
        %v789 = vunpack.c.h.b16 %v739
        %v790 = vunpack.c.l.b16 %v740
        %v791 = vunpack.c.h.b16 %v740
        %v792 = vunpack.c.l.b16 %v741
        %v793 = vunpack.c.h.b16 %v741
        %v794 = vunpack.c.l.b16 %v742
        %v795 = vunpack.c.h.b16 %v742
        %v796 = vunpack.c.l.b16 %v743
        %v797 = vunpack.c.h.b16 %v743
        %v798 = vpack.c.b16 %v768, %v766
        %v799 = vpack.c.b16 %v769, %v767
        %v800 = vpack.c.b16 %v772, %v770
        %v801 = vpack.c.b16 %v773, %v771
        %v802 = vpack.c.b16 %v776, %v774
        %v803 = vpack.c.b16 %v777, %v775
        %v804 = vpack.c.b16 %v780, %v778
        %v805 = vpack.c.b16 %v781, %v779
        %v806 = vpack.c.b16 %v784, %v782
        %v807 = vpack.c.b16 %v785, %v783
        %v808 = vpack.c.b16 %v788, %v786
        %v809 = vpack.c.b16 %v789, %v787
        %v810 = vpack.c.b16 %v792, %v790
        %v811 = vpack.c.b16 %v793, %v791
        %v812 = vpack.c.b16 %v796, %v794
        %v813 = vpack.c.b16 %v797, %v795
        %830 = vmatpush.bf16.msra.mxu0 %v812
        %831 = vmatpush.bf16.msra.mxu0 %v810
        %832 = vmatpush.bf16.msra.mxu0 %v808
        %833 = vmatpush.bf16.msra.mxu0 %v806
        %834 = vmatpush.bf16.msra.mxu0 %v804
        %835 = vmatpush.bf16.msra.mxu0 %v802
        %836 = vmatpush.bf16.msra.mxu0 %v800
        %837 = vmatpush.bf16.msra.mxu0 %v798
        %838 = vmatmul.bf16.gmra.mxu0 %v725
        %v839 = vpop.f32.mrf.mxu0
        %v840 = vadd.f32 %v746, %v839
        %v841 = vpop.f32.mrf.mxu0
        %v842 = vadd.f32 %v746, %v841
        %843 = vmatmul.bf16.gmra.mxu0 %v726
        %v844 = vpop.f32.mrf.mxu0
        %v845 = vadd.f32 %v746, %v844
        %v846 = vpop.f32.mrf.mxu0
        %v847 = vadd.f32 %v746, %v846
        %848 = vmatmul.bf16.gmra.mxu0 %v727
        %v849 = vpop.f32.mrf.mxu0
        %v850 = vadd.f32 %v746, %v849
        %v851 = vpop.f32.mrf.mxu0
        %v852 = vadd.f32 %v746, %v851
        %853 = vdwg.mxu0
        %854 = vmatpush.bf16.msra.mxu0 %v813
        %855 = vmatpush.bf16.msra.mxu0 %v811
        %856 = vmatpush.bf16.msra.mxu0 %v809
        %857 = vmatpush.bf16.msra.mxu0 %v807
        %858 = vmatpush.bf16.msra.mxu0 %v805
        %859 = vmatpush.bf16.msra.mxu0 %v803
        %860 = vmatpush.bf16.msra.mxu0 %v801
        %861 = vmatpush.bf16.msra.mxu0 %v799
        %862 = vmatmul.bf16.gmra.mxu0 %v725
        %v863 = vpop.f32.mrf.mxu0
        %v864 = vadd.f32 %v747, %v863
        %v865 = vpop.f32.mrf.mxu0
        %v866 = vadd.f32 %v747, %v865
        %867 = vmatmul.bf16.gmra.mxu0 %v726
        %v868 = vpop.f32.mrf.mxu0
        %v869 = vadd.f32 %v747, %v868
        %v870 = vpop.f32.mrf.mxu0
        %v871 = vadd.f32 %v747, %v870
        %872 = vmatmul.bf16.gmra.mxu0 %v727
        %v873 = vpop.f32.mrf.mxu0
        %v874 = vadd.f32 %v747, %v873
        %v875 = vpop.f32.mrf.mxu0
        %v876 = vadd.f32 %v747, %v875
        %877 = vdwg.mxu0
        %v878 = vmul.f32 %v840, 0.2
        %v879 = vmul.f32 %v864, 0.2
        %v880 = vmul.f32 %v842, 0.2
        %v881 = vmul.f32 %v866, 0.2
        %v882 = vmul.f32 %v845, 0.2
        %v883 = vmul.f32 %v869, 0.2
        %v884 = vmul.f32 %v847, 0.2
        %v885 = vmul.f32 %v871, 0.2
        %v886 = vmul.f32 %v850, 0.2
        %v887 = vmul.f32 %v874, 0.2
        %v888 = vmul.f32 %v852, 0.2
        %v889 = vmul.f32 %v876, 0.2
        %v890 = vmax.f32 %v840, %v878
        %v891 = vmax.f32 %v864, %v879
        %v892 = vmax.f32 %v842, %v880
        %v893 = vmax.f32 %v866, %v881
        %v894 = vmax.f32 %v845, %v882
        %v895 = vmax.f32 %v869, %v883
        %v896 = vmax.f32 %v847, %v884
        %v897 = vmax.f32 %v871, %v885
        %v898 = vmax.f32 %v850, %v886
        %v899 = vmax.f32 %v874, %v887
        %v900 = vmax.f32 %v852, %v888
        %v901 = vmax.f32 %v876, %v889
        %v902 = vadd.f32 %v515, %v890
        %v903 = vadd.f32 %v516, %v891
        %v904 = vadd.f32 %v517, %v892
        %v905 = vadd.f32 %v518, %v893
        %v906 = vadd.f32 %v519, %v894
        %v907 = vadd.f32 %v520, %v895
        %v908 = vadd.f32 %v521, %v896
        %v909 = vadd.f32 %v522, %v897
        %v910 = vadd.f32 %v523, %v898
        %v911 = vadd.f32 %v524, %v899
        %v912 = vadd.f32 %v525, %v900
        %v913 = vadd.f32 %v526, %v901
        %v914 = vpack.c.bf16 %v904, %v902
        %v915 = vpack.c.bf16 %v905, %v903
        %v916 = vpack.c.bf16 %v908, %v906
        %v917 = vpack.c.bf16 %v909, %v907
        %v918 = vpack.c.bf16 %v912, %v910
        %v919 = vpack.c.bf16 %v913, %v911
        %s920 = scalar_lea.vmem [#allocation6], 128
        %v921 = vld [vmem:[%s920] sm:$0xf]
        %v922 = vld [vmem:[%s920 + $0x4] sm:$0xf]
        %v923 = vld [vmem:[%s920 + $0x8] sm:$0xf]
        %v924 = vld [vmem:[%s920 + $0xc] sm:$0xf]
        %v925 = vld [vmem:[%s920 + $0x10] sm:$0xf]
        %v926 = vld [vmem:[%s920 + $0x14] sm:$0xf]
        %v927 = vld [vmem:[%s920 + $0x18] sm:$0xf]
        %v928 = vld [vmem:[%s920 + $0x1c] sm:$0xf]
        %v929 = vld [vmem:[%s920 + $0x20] sm:$0xf]
        %v930 = vld [vmem:[%s920 + $0x24] sm:$0xf]
        %v931 = vld [vmem:[%s920 + $0x28] sm:$0xf]
        %v932 = vld [vmem:[%s920 + $0x2c] sm:$0xf]
        %v933 = vld [vmem:[%s920 + $0x30] sm:$0xf]
        %v934 = vld [vmem:[%s920 + $0x34] sm:$0xf]
        %v935 = vld [vmem:[%s920 + $0x38] sm:$0xf]
        %v936 = vld [vmem:[%s920 + $0x3c] sm:$0xf]
        %v937 = vld [vmem:[%s920 + $0x40] sm:$0xf]
        %v938 = vld [vmem:[%s920 + $0x44] sm:$0xf]
        %v939 = vld [vmem:[%s920 + $0x48] sm:$0xf]
        %v940 = vld [vmem:[%s920 + $0x4c] sm:$0xf]
        %v941 = vld [vmem:[%s920 + $0x50] sm:$0xf]
        %v942 = vld [vmem:[%s920 + $0x54] sm:$0xf]
        %v943 = vld [vmem:[%s920 + $0x58] sm:$0xf]
        %v944 = vld [vmem:[%s920 + $0x5c] sm:$0xf]
        %v945 = vld [vmem:[%s920 + $0x60] sm:$0xf]
        %v946 = vld [vmem:[%s920 + $0x64] sm:$0xf]
        %v947 = vld [vmem:[%s920 + $0x68] sm:$0xf]
        %v948 = vld [vmem:[%s920 + $0x6c] sm:$0xf]
        %v949 = vld [vmem:[%s920 + $0x70] sm:$0xf]
        %v950 = vld [vmem:[%s920 + $0x74] sm:$0xf]
        %v951 = vld [vmem:[%s920 + $0x78] sm:$0xf]
        %v952 = vld [vmem:[%s920 + $0x7c] sm:$0xf]
        %s953 = scalar_lea.vmem [#allocation7], 1
        %v954 = vld [vmem:[%s953] sm:$0x1]
        %v956 = vperm.slane %v954, 0
        %v990 = vunpack.c.l.b16 %v921
        %v991 = vunpack.c.l.b16 %v922
        %v992 = vunpack.c.l.b16 %v923
        %v993 = vunpack.c.l.b16 %v924
        %v994 = vunpack.c.l.b16 %v925
        %v995 = vunpack.c.l.b16 %v926
        %v996 = vunpack.c.l.b16 %v927
        %v997 = vunpack.c.l.b16 %v928
        %v998 = vunpack.c.l.b16 %v929
        %v999 = vunpack.c.l.b16 %v930
        %v1000 = vunpack.c.l.b16 %v931
        %v1001 = vunpack.c.l.b16 %v932
        %v1002 = vunpack.c.l.b16 %v933
        %v1003 = vunpack.c.l.b16 %v934
        %v1004 = vunpack.c.l.b16 %v935
        %v1005 = vunpack.c.l.b16 %v936
        %v1006 = vunpack.c.l.b16 %v937
        %v1007 = vunpack.c.l.b16 %v938
        %v1008 = vunpack.c.l.b16 %v939
        %v1009 = vunpack.c.l.b16 %v940
        %v1010 = vunpack.c.l.b16 %v941
        %v1011 = vunpack.c.l.b16 %v942
        %v1012 = vunpack.c.l.b16 %v943
        %v1013 = vunpack.c.l.b16 %v944
        %v1014 = vunpack.c.l.b16 %v945
        %v1015 = vunpack.c.l.b16 %v946
        %v1016 = vunpack.c.l.b16 %v947
        %v1017 = vunpack.c.l.b16 %v948
        %v1018 = vunpack.c.l.b16 %v949
        %v1019 = vunpack.c.l.b16 %v950
        %v1020 = vunpack.c.l.b16 %v951
        %v1021 = vunpack.c.l.b16 %v952
        %v1022 = vpack.c.b16 %v991, %v990
        %v1023 = vpack.c.b16 %v993, %v992
        %v1024 = vpack.c.b16 %v995, %v994
        %v1025 = vpack.c.b16 %v997, %v996
        %v1026 = vpack.c.b16 %v999, %v998
        %v1027 = vpack.c.b16 %v1001, %v1000
        %v1028 = vpack.c.b16 %v1003, %v1002
        %v1029 = vpack.c.b16 %v1005, %v1004
        %v1030 = vpack.c.b16 %v1007, %v1006
        %v1031 = vpack.c.b16 %v1009, %v1008
        %v1032 = vpack.c.b16 %v1011, %v1010
        %v1033 = vpack.c.b16 %v1013, %v1012
        %v1034 = vpack.c.b16 %v1015, %v1014
        %v1035 = vpack.c.b16 %v1017, %v1016
        %v1036 = vpack.c.b16 %v1019, %v1018
        %v1037 = vpack.c.b16 %v1021, %v1020
        %1054 = vmatpush.bf16.msra.mxu0 %v1029
        %1055 = vmatpush.bf16.msra.mxu0 %v1028
        %1056 = vmatpush.bf16.msra.mxu0 %v1027
        %1057 = vmatpush.bf16.msra.mxu0 %v1026
        %1058 = vmatpush.bf16.msra.mxu0 %v1025
        %1059 = vmatpush.bf16.msra.mxu0 %v1024
        %1060 = vmatpush.bf16.msra.mxu0 %v1023
        %1061 = vmatpush.bf16.msra.mxu0 %v1022
        %1062 = vmatmul.bf16.gmra.mxu0 %v914
        %v1063 = vpop.f32.mrf.mxu0
        %v1064 = vadd.f32 %v956, %v1063
        %v1065 = vpop.f32.mrf.mxu0
        %v1066 = vadd.f32 %v956, %v1065
        %1067 = vmatmul.bf16.gmra.mxu0 %v916
        %v1068 = vpop.f32.mrf.mxu0
        %v1069 = vadd.f32 %v956, %v1068
        %v1070 = vpop.f32.mrf.mxu0
        %v1071 = vadd.f32 %v956, %v1070
        %1072 = vmatmul.bf16.gmra.mxu0 %v918
        %v1073 = vpop.f32.mrf.mxu0
        %v1074 = vadd.f32 %v956, %v1073
        %v1075 = vpop.f32.mrf.mxu0
        %v1076 = vadd.f32 %v956, %v1075
        %1077 = vdwg.mxu0
        %1078 = vmatpush.bf16.msra.mxu0 %v1037
        %1079 = vmatpush.bf16.msra.mxu0 %v1036
        %1080 = vmatpush.bf16.msra.mxu0 %v1035
        %1081 = vmatpush.bf16.msra.mxu0 %v1034
        %1082 = vmatpush.bf16.msra.mxu0 %v1033
        %1083 = vmatpush.bf16.msra.mxu0 %v1032
        %1084 = vmatpush.bf16.msra.mxu0 %v1031
        %1085 = vmatpush.bf16.msra.mxu0 %v1030
        %1086 = vmatmul.bf16.gmra.mxu0 %v915
        %v1087 = vpop.f32.mrf.mxu0
        %v1088 = vadd.f32 %v1064, %v1087
        %v1089 = vpop.f32.mrf.mxu0
        %v1090 = vadd.f32 %v1066, %v1089
        %1091 = vmatmul.bf16.gmra.mxu0 %v917
        %v1092 = vpop.f32.mrf.mxu0
        %v1093 = vadd.f32 %v1069, %v1092
        %v1094 = vpop.f32.mrf.mxu0
        %v1095 = vadd.f32 %v1071, %v1094
        %1096 = vmatmul.bf16.gmra.mxu0 %v919
        %v1097 = vpop.f32.mrf.mxu0
        %v1098 = vadd.f32 %v1074, %v1097
        %v1099 = vpop.f32.mrf.mxu0
        %v1100 = vadd.f32 %v1076, %v1099
        %1101 = vdwg.mxu0
        %v1102 = vmul.f32 %v1088, 0.2
        %v1103 = vmul.f32 %v1090, 0.2
        %v1104 = vmul.f32 %v1093, 0.2
        %v1105 = vmul.f32 %v1095, 0.2
        %v1106 = vmul.f32 %v1098, 0.2
        %v1107 = vmul.f32 %v1100, 0.2
        %v1108 = vmax.f32 %v1088, %v1102
        %v1109 = vmax.f32 %v1090, %v1103
        %v1110 = vmax.f32 %v1093, %v1104
        %v1111 = vmax.f32 %v1095, %v1105
        %v1112 = vmax.f32 %v1098, %v1106
        %v1113 = vmax.f32 %v1100, %v1107
        %v1114 = vpack.c.bf16 %v1109, %v1108
        %v1115 = vpack.c.bf16 %v1111, %v1110
        %v1116 = vpack.c.bf16 %v1113, %v1112
        %s1117 = scalar_lea.vmem [#allocation9], 128
        %v1118 = vld [vmem:[%s1117] sm:$0xff]
        %v1119 = vld [vmem:[%s1117 + $0x8] sm:$0xff]
        %v1120 = vld [vmem:[%s1117 + $0x10] sm:$0xff]
        %v1121 = vld [vmem:[%s1117 + $0x18] sm:$0xff]
        %v1122 = vld [vmem:[%s1117 + $0x20] sm:$0xff]
        %v1123 = vld [vmem:[%s1117 + $0x28] sm:$0xff]
        %v1124 = vld [vmem:[%s1117 + $0x30] sm:$0xff]
        %v1125 = vld [vmem:[%s1117 + $0x38] sm:$0xff]
        %v1126 = vld [vmem:[%s1117 + $0x40] sm:$0xff]
        %v1127 = vld [vmem:[%s1117 + $0x48] sm:$0xff]
        %v1128 = vld [vmem:[%s1117 + $0x50] sm:$0xff]
        %v1129 = vld [vmem:[%s1117 + $0x58] sm:$0xff]
        %v1130 = vld [vmem:[%s1117 + $0x60] sm:$0xff]
        %v1131 = vld [vmem:[%s1117 + $0x68] sm:$0xff]
        %v1132 = vld [vmem:[%s1117 + $0x70] sm:$0xff]
        %v1133 = vld [vmem:[%s1117 + $0x78] sm:$0xff]
        %s1134 = scalar_lea.vmem %s6, 2
        %v1135 = vld [vmem:[%s1134] sm:$0x3]
        %v1137 = vperm.slane %v1135, 0
        %v1138 = vperm.slane %v1135, 1
        %v1157 = vunpack.c.l.b16 %v1118
        %v1158 = vunpack.c.h.b16 %v1118
        %v1159 = vunpack.c.l.b16 %v1119
        %v1160 = vunpack.c.h.b16 %v1119
        %v1161 = vunpack.c.l.b16 %v1120
        %v1162 = vunpack.c.h.b16 %v1120
        %v1163 = vunpack.c.l.b16 %v1121
        %v1164 = vunpack.c.h.b16 %v1121
        %v1165 = vunpack.c.l.b16 %v1122
        %v1166 = vunpack.c.h.b16 %v1122
        %v1167 = vunpack.c.l.b16 %v1123
        %v1168 = vunpack.c.h.b16 %v1123
        %v1169 = vunpack.c.l.b16 %v1124
        %v1170 = vunpack.c.h.b16 %v1124
        %v1171 = vunpack.c.l.b16 %v1125
        %v1172 = vunpack.c.h.b16 %v1125
        %v1173 = vunpack.c.l.b16 %v1126
        %v1174 = vunpack.c.h.b16 %v1126
        %v1175 = vunpack.c.l.b16 %v1127
        %v1176 = vunpack.c.h.b16 %v1127
        %v1177 = vunpack.c.l.b16 %v1128
        %v1178 = vunpack.c.h.b16 %v1128
        %v1179 = vunpack.c.l.b16 %v1129
        %v1180 = vunpack.c.h.b16 %v1129
        %v1181 = vunpack.c.l.b16 %v1130
        %v1182 = vunpack.c.h.b16 %v1130
        %v1183 = vunpack.c.l.b16 %v1131
        %v1184 = vunpack.c.h.b16 %v1131
        %v1185 = vunpack.c.l.b16 %v1132
        %v1186 = vunpack.c.h.b16 %v1132
        %v1187 = vunpack.c.l.b16 %v1133
        %v1188 = vunpack.c.h.b16 %v1133
        %v1189 = vpack.c.b16 %v1159, %v1157
        %v1190 = vpack.c.b16 %v1160, %v1158
        %v1191 = vpack.c.b16 %v1163, %v1161
        %v1192 = vpack.c.b16 %v1164, %v1162
        %v1193 = vpack.c.b16 %v1167, %v1165
        %v1194 = vpack.c.b16 %v1168, %v1166
        %v1195 = vpack.c.b16 %v1171, %v1169
        %v1196 = vpack.c.b16 %v1172, %v1170
        %v1197 = vpack.c.b16 %v1175, %v1173
        %v1198 = vpack.c.b16 %v1176, %v1174
        %v1199 = vpack.c.b16 %v1179, %v1177
        %v1200 = vpack.c.b16 %v1180, %v1178
        %v1201 = vpack.c.b16 %v1183, %v1181
        %v1202 = vpack.c.b16 %v1184, %v1182
        %v1203 = vpack.c.b16 %v1187, %v1185
        %v1204 = vpack.c.b16 %v1188, %v1186
        %1221 = vmatpush.bf16.msra.mxu0 %v1203
        %1222 = vmatpush.bf16.msra.mxu0 %v1201
        %1223 = vmatpush.bf16.msra.mxu0 %v1199
        %1224 = vmatpush.bf16.msra.mxu0 %v1197
        %1225 = vmatpush.bf16.msra.mxu0 %v1195
        %1226 = vmatpush.bf16.msra.mxu0 %v1193
        %1227 = vmatpush.bf16.msra.mxu0 %v1191
        %1228 = vmatpush.bf16.msra.mxu0 %v1189
        %1229 = vmatmul.bf16.gmra.mxu0 %v1114
        %v1230 = vpop.f32.mrf.mxu0
        %v1231 = vadd.f32 %v1137, %v1230
        %v1232 = vpop.f32.mrf.mxu0
        %v1233 = vadd.f32 %v1137, %v1232
        %1234 = vmatmul.bf16.gmra.mxu0 %v1115
        %v1235 = vpop.f32.mrf.mxu0
        %v1236 = vadd.f32 %v1137, %v1235
        %v1237 = vpop.f32.mrf.mxu0
        %v1238 = vadd.f32 %v1137, %v1237
        %1239 = vmatmul.bf16.gmra.mxu0 %v1116
        %v1240 = vpop.f32.mrf.mxu0
        %v1241 = vadd.f32 %v1137, %v1240
        %v1242 = vpop.f32.mrf.mxu0
        %v1243 = vadd.f32 %v1137, %v1242
        %1244 = vdwg.mxu0
        %1245 = vmatpush.bf16.msra.mxu0 %v1204
        %1246 = vmatpush.bf16.msra.mxu0 %v1202
        %1247 = vmatpush.bf16.msra.mxu0 %v1200
        %1248 = vmatpush.bf16.msra.mxu0 %v1198
        %1249 = vmatpush.bf16.msra.mxu0 %v1196
        %1250 = vmatpush.bf16.msra.mxu0 %v1194
        %1251 = vmatpush.bf16.msra.mxu0 %v1192
        %1252 = vmatpush.bf16.msra.mxu0 %v1190
        %1253 = vmatmul.bf16.gmra.mxu0 %v1114
        %v1254 = vpop.f32.mrf.mxu0
        %v1255 = vadd.f32 %v1138, %v1254
        %v1256 = vpop.f32.mrf.mxu0
        %v1257 = vadd.f32 %v1138, %v1256
        %1258 = vmatmul.bf16.gmra.mxu0 %v1115
        %v1259 = vpop.f32.mrf.mxu0
        %v1260 = vadd.f32 %v1138, %v1259
        %v1261 = vpop.f32.mrf.mxu0
        %v1262 = vadd.f32 %v1138, %v1261
        %1263 = vmatmul.bf16.gmra.mxu0 %v1116
        %v1264 = vpop.f32.mrf.mxu0
        %v1265 = vadd.f32 %v1138, %v1264
        %v1266 = vpop.f32.mrf.mxu0
        %v1267 = vadd.f32 %v1138, %v1266
        %1268 = vdwg.mxu0
        %v1269 = vmul.f32 %v1231, 0.2
        %v1270 = vmul.f32 %v1255, 0.2
        %v1271 = vmul.f32 %v1233, 0.2
        %v1272 = vmul.f32 %v1257, 0.2
        %v1273 = vmul.f32 %v1236, 0.2
        %v1274 = vmul.f32 %v1260, 0.2
        %v1275 = vmul.f32 %v1238, 0.2
        %v1276 = vmul.f32 %v1262, 0.2
        %v1277 = vmul.f32 %v1241, 0.2
        %v1278 = vmul.f32 %v1265, 0.2
        %v1279 = vmul.f32 %v1243, 0.2
        %v1280 = vmul.f32 %v1267, 0.2
        %v1281 = vmax.f32 %v1231, %v1269
        %v1282 = vmax.f32 %v1255, %v1270
        %v1283 = vmax.f32 %v1233, %v1271
        %v1284 = vmax.f32 %v1257, %v1272
        %v1285 = vmax.f32 %v1236, %v1273
        %v1286 = vmax.f32 %v1260, %v1274
        %v1287 = vmax.f32 %v1238, %v1275
        %v1288 = vmax.f32 %v1262, %v1276
        %v1289 = vmax.f32 %v1241, %v1277
        %v1290 = vmax.f32 %v1265, %v1278
        %v1291 = vmax.f32 %v1243, %v1279
        %v1292 = vmax.f32 %v1267, %v1280
        %v1293 = vadd.f32 %v902, %v1281
        %v1294 = vadd.f32 %v903, %v1282
        %v1295 = vadd.f32 %v904, %v1283
        %v1296 = vadd.f32 %v905, %v1284
        %v1297 = vadd.f32 %v906, %v1285
        %v1298 = vadd.f32 %v907, %v1286
        %v1299 = vadd.f32 %v908, %v1287
        %v1300 = vadd.f32 %v909, %v1288
        %v1301 = vadd.f32 %v910, %v1289
        %v1302 = vadd.f32 %v911, %v1290
        %v1303 = vadd.f32 %v912, %v1291
        %v1304 = vadd.f32 %v913, %v1292
        %v1305 = vpack.c.bf16 %v1295, %v1293
        %v1306 = vpack.c.bf16 %v1296, %v1294
        %v1307 = vpack.c.bf16 %v1299, %v1297
        %v1308 = vpack.c.bf16 %v1300, %v1298
        %v1309 = vpack.c.bf16 %v1303, %v1301
        %v1310 = vpack.c.bf16 %v1304, %v1302
        %s1311 = scalar_lea.vmem [#allocation6], 256
        %v1312 = vld [vmem:[%s1311] sm:$0xf]
        %v1313 = vld [vmem:[%s1311 + $0x4] sm:$0xf]
        %v1314 = vld [vmem:[%s1311 + $0x8] sm:$0xf]
        %v1315 = vld [vmem:[%s1311 + $0xc] sm:$0xf]
        %v1316 = vld [vmem:[%s1311 + $0x10] sm:$0xf]
        %v1317 = vld [vmem:[%s1311 + $0x14] sm:$0xf]
        %v1318 = vld [vmem:[%s1311 + $0x18] sm:$0xf]
        %v1319 = vld [vmem:[%s1311 + $0x1c] sm:$0xf]
        %v1320 = vld [vmem:[%s1311 + $0x20] sm:$0xf]
        %v1321 = vld [vmem:[%s1311 + $0x24] sm:$0xf]
        %v1322 = vld [vmem:[%s1311 + $0x28] sm:$0xf]
        %v1323 = vld [vmem:[%s1311 + $0x2c] sm:$0xf]
        %v1324 = vld [vmem:[%s1311 + $0x30] sm:$0xf]
        %v1325 = vld [vmem:[%s1311 + $0x34] sm:$0xf]
        %v1326 = vld [vmem:[%s1311 + $0x38] sm:$0xf]
        %v1327 = vld [vmem:[%s1311 + $0x3c] sm:$0xf]
        %v1328 = vld [vmem:[%s1311 + $0x40] sm:$0xf]
        %v1329 = vld [vmem:[%s1311 + $0x44] sm:$0xf]
        %v1330 = vld [vmem:[%s1311 + $0x48] sm:$0xf]
        %v1331 = vld [vmem:[%s1311 + $0x4c] sm:$0xf]
        %v1332 = vld [vmem:[%s1311 + $0x50] sm:$0xf]
        %v1333 = vld [vmem:[%s1311 + $0x54] sm:$0xf]
        %v1334 = vld [vmem:[%s1311 + $0x58] sm:$0xf]
        %v1335 = vld [vmem:[%s1311 + $0x5c] sm:$0xf]
        %v1336 = vld [vmem:[%s1311 + $0x60] sm:$0xf]
        %v1337 = vld [vmem:[%s1311 + $0x64] sm:$0xf]
        %v1338 = vld [vmem:[%s1311 + $0x68] sm:$0xf]
        %v1339 = vld [vmem:[%s1311 + $0x6c] sm:$0xf]
        %v1340 = vld [vmem:[%s1311 + $0x70] sm:$0xf]
        %v1341 = vld [vmem:[%s1311 + $0x74] sm:$0xf]
        %v1342 = vld [vmem:[%s1311 + $0x78] sm:$0xf]
        %v1343 = vld [vmem:[%s1311 + $0x7c] sm:$0xf]
        %s1344 = scalar_lea.vmem [#allocation7], 2
        %v1345 = vld [vmem:[%s1344] sm:$0x1]
        %v1347 = vperm.slane %v1345, 0
        %v1381 = vunpack.c.l.b16 %v1312
        %v1382 = vunpack.c.l.b16 %v1313
        %v1383 = vunpack.c.l.b16 %v1314
        %v1384 = vunpack.c.l.b16 %v1315
        %v1385 = vunpack.c.l.b16 %v1316
        %v1386 = vunpack.c.l.b16 %v1317
        %v1387 = vunpack.c.l.b16 %v1318
        %v1388 = vunpack.c.l.b16 %v1319
        %v1389 = vunpack.c.l.b16 %v1320
        %v1390 = vunpack.c.l.b16 %v1321
        %v1391 = vunpack.c.l.b16 %v1322
        %v1392 = vunpack.c.l.b16 %v1323
        %v1393 = vunpack.c.l.b16 %v1324
        %v1394 = vunpack.c.l.b16 %v1325
        %v1395 = vunpack.c.l.b16 %v1326
        %v1396 = vunpack.c.l.b16 %v1327
        %v1397 = vunpack.c.l.b16 %v1328
        %v1398 = vunpack.c.l.b16 %v1329
        %v1399 = vunpack.c.l.b16 %v1330
        %v1400 = vunpack.c.l.b16 %v1331
        %v1401 = vunpack.c.l.b16 %v1332
        %v1402 = vunpack.c.l.b16 %v1333
        %v1403 = vunpack.c.l.b16 %v1334
        %v1404 = vunpack.c.l.b16 %v1335
        %v1405 = vunpack.c.l.b16 %v1336
        %v1406 = vunpack.c.l.b16 %v1337
        %v1407 = vunpack.c.l.b16 %v1338
        %v1408 = vunpack.c.l.b16 %v1339
        %v1409 = vunpack.c.l.b16 %v1340
        %v1410 = vunpack.c.l.b16 %v1341
        %v1411 = vunpack.c.l.b16 %v1342
        %v1412 = vunpack.c.l.b16 %v1343
        %v1413 = vpack.c.b16 %v1382, %v1381
        %v1414 = vpack.c.b16 %v1384, %v1383
        %v1415 = vpack.c.b16 %v1386, %v1385
        %v1416 = vpack.c.b16 %v1388, %v1387
        %v1417 = vpack.c.b16 %v1390, %v1389
        %v1418 = vpack.c.b16 %v1392, %v1391
        %v1419 = vpack.c.b16 %v1394, %v1393
        %v1420 = vpack.c.b16 %v1396, %v1395
        %v1421 = vpack.c.b16 %v1398, %v1397
        %v1422 = vpack.c.b16 %v1400, %v1399
        %v1423 = vpack.c.b16 %v1402, %v1401
        %v1424 = vpack.c.b16 %v1404, %v1403
        %v1425 = vpack.c.b16 %v1406, %v1405
        %v1426 = vpack.c.b16 %v1408, %v1407
        %v1427 = vpack.c.b16 %v1410, %v1409
        %v1428 = vpack.c.b16 %v1412, %v1411
        %1445 = vmatpush.bf16.msra.mxu0 %v1420
        %1446 = vmatpush.bf16.msra.mxu0 %v1419
        %1447 = vmatpush.bf16.msra.mxu0 %v1418
        %1448 = vmatpush.bf16.msra.mxu0 %v1417
        %1449 = vmatpush.bf16.msra.mxu0 %v1416
        %1450 = vmatpush.bf16.msra.mxu0 %v1415
        %1451 = vmatpush.bf16.msra.mxu0 %v1414
        %1452 = vmatpush.bf16.msra.mxu0 %v1413
        %1453 = vmatmul.bf16.gmra.mxu0 %v1305
        %v1454 = vpop.f32.mrf.mxu0
        %v1455 = vadd.f32 %v1347, %v1454
        %v1456 = vpop.f32.mrf.mxu0
        %v1457 = vadd.f32 %v1347, %v1456
        %1458 = vmatmul.bf16.gmra.mxu0 %v1307
        %v1459 = vpop.f32.mrf.mxu0
        %v1460 = vadd.f32 %v1347, %v1459
        %v1461 = vpop.f32.mrf.mxu0
        %v1462 = vadd.f32 %v1347, %v1461
        %1463 = vmatmul.bf16.gmra.mxu0 %v1309
        %v1464 = vpop.f32.mrf.mxu0
        %v1465 = vadd.f32 %v1347, %v1464
        %v1466 = vpop.f32.mrf.mxu0
        %v1467 = vadd.f32 %v1347, %v1466
        %1468 = vdwg.mxu0
        %1469 = vmatpush.bf16.msra.mxu0 %v1428
        %1470 = vmatpush.bf16.msra.mxu0 %v1427
        %1471 = vmatpush.bf16.msra.mxu0 %v1426
        %1472 = vmatpush.bf16.msra.mxu0 %v1425
        %1473 = vmatpush.bf16.msra.mxu0 %v1424
        %1474 = vmatpush.bf16.msra.mxu0 %v1423
        %1475 = vmatpush.bf16.msra.mxu0 %v1422
        %1476 = vmatpush.bf16.msra.mxu0 %v1421
        %1477 = vmatmul.bf16.gmra.mxu0 %v1306
        %v1478 = vpop.f32.mrf.mxu0
        %v1479 = vadd.f32 %v1455, %v1478
        %v1480 = vpop.f32.mrf.mxu0
        %v1481 = vadd.f32 %v1457, %v1480
        %1482 = vmatmul.bf16.gmra.mxu0 %v1308
        %v1483 = vpop.f32.mrf.mxu0
        %v1484 = vadd.f32 %v1460, %v1483
        %v1485 = vpop.f32.mrf.mxu0
        %v1486 = vadd.f32 %v1462, %v1485
        %1487 = vmatmul.bf16.gmra.mxu0 %v1310
        %v1488 = vpop.f32.mrf.mxu0
        %v1489 = vadd.f32 %v1465, %v1488
        %v1490 = vpop.f32.mrf.mxu0
        %v1491 = vadd.f32 %v1467, %v1490
        %1492 = vdwg.mxu0
        %v1493 = vmul.f32 %v1479, 0.2
        %v1494 = vmul.f32 %v1481, 0.2
        %v1495 = vmul.f32 %v1484, 0.2
        %v1496 = vmul.f32 %v1486, 0.2
        %v1497 = vmul.f32 %v1489, 0.2
        %v1498 = vmul.f32 %v1491, 0.2
        %v1499 = vmax.f32 %v1479, %v1493
        %v1500 = vmax.f32 %v1481, %v1494
        %v1501 = vmax.f32 %v1484, %v1495
        %v1502 = vmax.f32 %v1486, %v1496
        %v1503 = vmax.f32 %v1489, %v1497
        %v1504 = vmax.f32 %v1491, %v1498
        %v1505 = vpack.c.bf16 %v1500, %v1499
        %v1506 = vpack.c.bf16 %v1502, %v1501
        %v1507 = vpack.c.bf16 %v1504, %v1503
        %s1508 = scalar_lea.vmem [#allocation9], 256
        %v1509 = vld [vmem:[%s1508] sm:$0xff]
        %v1510 = vld [vmem:[%s1508 + $0x8] sm:$0xff]
        %v1511 = vld [vmem:[%s1508 + $0x10] sm:$0xff]
        %v1512 = vld [vmem:[%s1508 + $0x18] sm:$0xff]
        %v1513 = vld [vmem:[%s1508 + $0x20] sm:$0xff]
        %v1514 = vld [vmem:[%s1508 + $0x28] sm:$0xff]
        %v1515 = vld [vmem:[%s1508 + $0x30] sm:$0xff]
        %v1516 = vld [vmem:[%s1508 + $0x38] sm:$0xff]
        %v1517 = vld [vmem:[%s1508 + $0x40] sm:$0xff]
        %v1518 = vld [vmem:[%s1508 + $0x48] sm:$0xff]
        %v1519 = vld [vmem:[%s1508 + $0x50] sm:$0xff]
        %v1520 = vld [vmem:[%s1508 + $0x58] sm:$0xff]
        %v1521 = vld [vmem:[%s1508 + $0x60] sm:$0xff]
        %v1522 = vld [vmem:[%s1508 + $0x68] sm:$0xff]
        %v1523 = vld [vmem:[%s1508 + $0x70] sm:$0xff]
        %v1524 = vld [vmem:[%s1508 + $0x78] sm:$0xff]
        %s1525 = scalar_lea.vmem %s6, 4
        %v1526 = vld [vmem:[%s1525] sm:$0x3]
        %v1528 = vperm.slane %v1526, 0
        %v1529 = vperm.slane %v1526, 1
        %v1548 = vunpack.c.l.b16 %v1509
        %v1549 = vunpack.c.h.b16 %v1509
        %v1550 = vunpack.c.l.b16 %v1510
        %v1551 = vunpack.c.h.b16 %v1510
        %v1552 = vunpack.c.l.b16 %v1511
        %v1553 = vunpack.c.h.b16 %v1511
        %v1554 = vunpack.c.l.b16 %v1512
        %v1555 = vunpack.c.h.b16 %v1512
        %v1556 = vunpack.c.l.b16 %v1513
        %v1557 = vunpack.c.h.b16 %v1513
        %v1558 = vunpack.c.l.b16 %v1514
        %v1559 = vunpack.c.h.b16 %v1514
        %v1560 = vunpack.c.l.b16 %v1515
        %v1561 = vunpack.c.h.b16 %v1515
        %v1562 = vunpack.c.l.b16 %v1516
        %v1563 = vunpack.c.h.b16 %v1516
        %v1564 = vunpack.c.l.b16 %v1517
        %v1565 = vunpack.c.h.b16 %v1517
        %v1566 = vunpack.c.l.b16 %v1518
        %v1567 = vunpack.c.h.b16 %v1518
        %v1568 = vunpack.c.l.b16 %v1519
        %v1569 = vunpack.c.h.b16 %v1519
        %v1570 = vunpack.c.l.b16 %v1520
        %v1571 = vunpack.c.h.b16 %v1520
        %v1572 = vunpack.c.l.b16 %v1521
        %v1573 = vunpack.c.h.b16 %v1521
        %v1574 = vunpack.c.l.b16 %v1522
        %v1575 = vunpack.c.h.b16 %v1522
        %v1576 = vunpack.c.l.b16 %v1523
        %v1577 = vunpack.c.h.b16 %v1523
        %v1578 = vunpack.c.l.b16 %v1524
        %v1579 = vunpack.c.h.b16 %v1524
        %v1580 = vpack.c.b16 %v1550, %v1548
        %v1581 = vpack.c.b16 %v1551, %v1549
        %v1582 = vpack.c.b16 %v1554, %v1552
        %v1583 = vpack.c.b16 %v1555, %v1553
        %v1584 = vpack.c.b16 %v1558, %v1556
        %v1585 = vpack.c.b16 %v1559, %v1557
        %v1586 = vpack.c.b16 %v1562, %v1560
        %v1587 = vpack.c.b16 %v1563, %v1561
        %v1588 = vpack.c.b16 %v1566, %v1564
        %v1589 = vpack.c.b16 %v1567, %v1565
        %v1590 = vpack.c.b16 %v1570, %v1568
        %v1591 = vpack.c.b16 %v1571, %v1569
        %v1592 = vpack.c.b16 %v1574, %v1572
        %v1593 = vpack.c.b16 %v1575, %v1573
        %v1594 = vpack.c.b16 %v1578, %v1576
        %v1595 = vpack.c.b16 %v1579, %v1577
        %1612 = vmatpush.bf16.msra.mxu0 %v1594
        %1613 = vmatpush.bf16.msra.mxu0 %v1592
        %1614 = vmatpush.bf16.msra.mxu0 %v1590
        %1615 = vmatpush.bf16.msra.mxu0 %v1588
        %1616 = vmatpush.bf16.msra.mxu0 %v1586
        %1617 = vmatpush.bf16.msra.mxu0 %v1584
        %1618 = vmatpush.bf16.msra.mxu0 %v1582
        %1619 = vmatpush.bf16.msra.mxu0 %v1580
        %1620 = vmatmul.bf16.gmra.mxu0 %v1505
        %v1621 = vpop.f32.mrf.mxu0
        %v1622 = vadd.f32 %v1528, %v1621
        %v1623 = vpop.f32.mrf.mxu0
        %v1624 = vadd.f32 %v1528, %v1623
        %1625 = vmatmul.bf16.gmra.mxu0 %v1506
        %v1626 = vpop.f32.mrf.mxu0
        %v1627 = vadd.f32 %v1528, %v1626
        %v1628 = vpop.f32.mrf.mxu0
        %v1629 = vadd.f32 %v1528, %v1628
        %1630 = vmatmul.bf16.gmra.mxu0 %v1507
        %v1631 = vpop.f32.mrf.mxu0
        %v1632 = vadd.f32 %v1528, %v1631
        %v1633 = vpop.f32.mrf.mxu0
        %v1634 = vadd.f32 %v1528, %v1633
        %1635 = vdwg.mxu0
        %1636 = vmatpush.bf16.msra.mxu0 %v1595
        %1637 = vmatpush.bf16.msra.mxu0 %v1593
        %1638 = vmatpush.bf16.msra.mxu0 %v1591
        %1639 = vmatpush.bf16.msra.mxu0 %v1589
        %1640 = vmatpush.bf16.msra.mxu0 %v1587
        %1641 = vmatpush.bf16.msra.mxu0 %v1585
        %1642 = vmatpush.bf16.msra.mxu0 %v1583
        %1643 = vmatpush.bf16.msra.mxu0 %v1581
        %1644 = vmatmul.bf16.gmra.mxu0 %v1505
        %v1645 = vpop.f32.mrf.mxu0
        %v1646 = vadd.f32 %v1529, %v1645
        %v1647 = vpop.f32.mrf.mxu0
        %v1648 = vadd.f32 %v1529, %v1647
        %1649 = vmatmul.bf16.gmra.mxu0 %v1506
        %v1650 = vpop.f32.mrf.mxu0
        %v1651 = vadd.f32 %v1529, %v1650
        %v1652 = vpop.f32.mrf.mxu0
        %v1653 = vadd.f32 %v1529, %v1652
        %1654 = vmatmul.bf16.gmra.mxu0 %v1507
        %v1655 = vpop.f32.mrf.mxu0
        %v1656 = vadd.f32 %v1529, %v1655
        %v1657 = vpop.f32.mrf.mxu0
        %v1658 = vadd.f32 %v1529, %v1657
        %1659 = vdwg.mxu0
        %v1660 = vmul.f32 %v1622, 0.2
        %v1661 = vmul.f32 %v1646, 0.2
        %v1662 = vmul.f32 %v1624, 0.2
        %v1663 = vmul.f32 %v1648, 0.2
        %v1664 = vmul.f32 %v1627, 0.2
        %v1665 = vmul.f32 %v1651, 0.2
        %v1666 = vmul.f32 %v1629, 0.2
        %v1667 = vmul.f32 %v1653, 0.2
        %v1668 = vmul.f32 %v1632, 0.2
        %v1669 = vmul.f32 %v1656, 0.2
        %v1670 = vmul.f32 %v1634, 0.2
        %v1671 = vmul.f32 %v1658, 0.2
        %v1672 = vmax.f32 %v1622, %v1660
        %v1673 = vmax.f32 %v1646, %v1661
        %v1674 = vmax.f32 %v1624, %v1662
        %v1675 = vmax.f32 %v1648, %v1663
        %v1676 = vmax.f32 %v1627, %v1664
        %v1677 = vmax.f32 %v1651, %v1665
        %v1678 = vmax.f32 %v1629, %v1666
        %v1679 = vmax.f32 %v1653, %v1667
        %v1680 = vmax.f32 %v1632, %v1668
        %v1681 = vmax.f32 %v1656, %v1669
        %v1682 = vmax.f32 %v1634, %v1670
        %v1683 = vmax.f32 %v1658, %v1671
        %v1684 = vadd.f32 %v1293, %v1672
        %v1685 = vadd.f32 %v1294, %v1673
        %v1686 = vadd.f32 %v1295, %v1674
        %v1687 = vadd.f32 %v1296, %v1675
        %v1688 = vadd.f32 %v1297, %v1676
        %v1689 = vadd.f32 %v1298, %v1677
        %v1690 = vadd.f32 %v1299, %v1678
        %v1691 = vadd.f32 %v1300, %v1679
        %v1692 = vadd.f32 %v1301, %v1680
        %v1693 = vadd.f32 %v1302, %v1681
        %v1694 = vadd.f32 %v1303, %v1682
        %v1695 = vadd.f32 %v1304, %v1683
        %v1696 = vpack.c.bf16 %v1686, %v1684
        %v1697 = vpack.c.bf16 %v1687, %v1685
        %v1698 = vpack.c.bf16 %v1690, %v1688
        %v1699 = vpack.c.bf16 %v1691, %v1689
        %v1700 = vpack.c.bf16 %v1694, %v1692
        %v1701 = vpack.c.bf16 %v1695, %v1693
        %v1702 = vld [vmem:[%s7] sm:$0xf]
        %v1703 = vld [vmem:[%s7 + $0x4] sm:$0xf]
        %v1704 = vld [vmem:[%s7 + $0x8] sm:$0xf]
        %v1705 = vld [vmem:[%s7 + $0xc] sm:$0xf]
        %v1706 = vld [vmem:[%s7 + $0x10] sm:$0xf]
        %v1707 = vld [vmem:[%s7 + $0x14] sm:$0xf]
        %v1708 = vld [vmem:[%s7 + $0x18] sm:$0xf]
        %v1709 = vld [vmem:[%s7 + $0x1c] sm:$0xf]
        %v1710 = vld [vmem:[%s7 + $0x20] sm:$0xf]
        %v1711 = vld [vmem:[%s7 + $0x24] sm:$0xf]
        %v1712 = vld [vmem:[%s7 + $0x28] sm:$0xf]
        %v1713 = vld [vmem:[%s7 + $0x2c] sm:$0xf]
        %v1714 = vld [vmem:[%s7 + $0x30] sm:$0xf]
        %v1715 = vld [vmem:[%s7 + $0x34] sm:$0xf]
        %v1716 = vld [vmem:[%s7 + $0x38] sm:$0xf]
        %v1717 = vld [vmem:[%s7 + $0x3c] sm:$0xf]
        %v1718 = vld [vmem:[%s7 + $0x40] sm:$0xf]
        %v1719 = vld [vmem:[%s7 + $0x44] sm:$0xf]
        %v1720 = vld [vmem:[%s7 + $0x48] sm:$0xf]
        %v1721 = vld [vmem:[%s7 + $0x4c] sm:$0xf]
        %v1722 = vld [vmem:[%s7 + $0x50] sm:$0xf]
        %v1723 = vld [vmem:[%s7 + $0x54] sm:$0xf]
        %v1724 = vld [vmem:[%s7 + $0x58] sm:$0xf]
        %v1725 = vld [vmem:[%s7 + $0x5c] sm:$0xf]
        %v1726 = vld [vmem:[%s7 + $0x60] sm:$0xf]
        %v1727 = vld [vmem:[%s7 + $0x64] sm:$0xf]
        %v1728 = vld [vmem:[%s7 + $0x68] sm:$0xf]
        %v1729 = vld [vmem:[%s7 + $0x6c] sm:$0xf]
        %v1730 = vld [vmem:[%s7 + $0x70] sm:$0xf]
        %v1731 = vld [vmem:[%s7 + $0x74] sm:$0xf]
        %v1732 = vld [vmem:[%s7 + $0x78] sm:$0xf]
        %v1733 = vld [vmem:[%s7 + $0x7c] sm:$0xf]
        %v1734 = vld [vmem:[%s8] sm:$0x1]
        %v1736 = vperm.slane %v1734, 0
        %v1770 = vunpack.c.l.b16 %v1702
        %v1771 = vunpack.c.l.b16 %v1703
        %v1772 = vunpack.c.l.b16 %v1704
        %v1773 = vunpack.c.l.b16 %v1705
        %v1774 = vunpack.c.l.b16 %v1706
        %v1775 = vunpack.c.l.b16 %v1707
        %v1776 = vunpack.c.l.b16 %v1708
        %v1777 = vunpack.c.l.b16 %v1709
        %v1778 = vunpack.c.l.b16 %v1710
        %v1779 = vunpack.c.l.b16 %v1711
        %v1780 = vunpack.c.l.b16 %v1712
        %v1781 = vunpack.c.l.b16 %v1713
        %v1782 = vunpack.c.l.b16 %v1714
        %v1783 = vunpack.c.l.b16 %v1715
        %v1784 = vunpack.c.l.b16 %v1716
        %v1785 = vunpack.c.l.b16 %v1717
        %v1786 = vunpack.c.l.b16 %v1718
        %v1787 = vunpack.c.l.b16 %v1719
        %v1788 = vunpack.c.l.b16 %v1720
        %v1789 = vunpack.c.l.b16 %v1721
        %v1790 = vunpack.c.l.b16 %v1722
        %v1791 = vunpack.c.l.b16 %v1723
        %v1792 = vunpack.c.l.b16 %v1724
        %v1793 = vunpack.c.l.b16 %v1725
        %v1794 = vunpack.c.l.b16 %v1726
        %v1795 = vunpack.c.l.b16 %v1727
        %v1796 = vunpack.c.l.b16 %v1728
        %v1797 = vunpack.c.l.b16 %v1729
        %v1798 = vunpack.c.l.b16 %v1730
        %v1799 = vunpack.c.l.b16 %v1731
        %v1800 = vunpack.c.l.b16 %v1732
        %v1801 = vunpack.c.l.b16 %v1733
        %v1802 = vpack.c.b16 %v1771, %v1770
        %v1803 = vpack.c.b16 %v1773, %v1772
        %v1804 = vpack.c.b16 %v1775, %v1774
        %v1805 = vpack.c.b16 %v1777, %v1776
        %v1806 = vpack.c.b16 %v1779, %v1778
        %v1807 = vpack.c.b16 %v1781, %v1780
        %v1808 = vpack.c.b16 %v1783, %v1782
        %v1809 = vpack.c.b16 %v1785, %v1784
        %v1810 = vpack.c.b16 %v1787, %v1786
        %v1811 = vpack.c.b16 %v1789, %v1788
        %v1812 = vpack.c.b16 %v1791, %v1790
        %v1813 = vpack.c.b16 %v1793, %v1792
        %v1814 = vpack.c.b16 %v1795, %v1794
        %v1815 = vpack.c.b16 %v1797, %v1796
        %v1816 = vpack.c.b16 %v1799, %v1798
        %v1817 = vpack.c.b16 %v1801, %v1800
        %1834 = vmatpush.bf16.msra.mxu0 %v1809
        %1835 = vmatpush.bf16.msra.mxu0 %v1808
        %1836 = vmatpush.bf16.msra.mxu0 %v1807
        %1837 = vmatpush.bf16.msra.mxu0 %v1806
        %1838 = vmatpush.bf16.msra.mxu0 %v1805
        %1839 = vmatpush.bf16.msra.mxu0 %v1804
        %1840 = vmatpush.bf16.msra.mxu0 %v1803
        %1841 = vmatpush.bf16.msra.mxu0 %v1802
        %1842 = vmatmul.bf16.gmra.mxu0 %v1696
        %v1843 = vpop.f32.mrf.mxu0
        %v1844 = vadd.f32 %v1736, %v1843
        %v1845 = vpop.f32.mrf.mxu0
        %v1846 = vadd.f32 %v1736, %v1845
        %1847 = vmatmul.bf16.gmra.mxu0 %v1698
        %v1848 = vpop.f32.mrf.mxu0
        %v1849 = vadd.f32 %v1736, %v1848
        %v1850 = vpop.f32.mrf.mxu0
        %v1851 = vadd.f32 %v1736, %v1850
        %1852 = vmatmul.bf16.gmra.mxu0 %v1700
        %v1853 = vpop.f32.mrf.mxu0
        %v1854 = vadd.f32 %v1736, %v1853
        %v1855 = vpop.f32.mrf.mxu0
        %v1856 = vadd.f32 %v1736, %v1855
        %1857 = vdwg.mxu0
        %1858 = vmatpush.bf16.msra.mxu0 %v1817
        %1859 = vmatpush.bf16.msra.mxu0 %v1816
        %1860 = vmatpush.bf16.msra.mxu0 %v1815
        %1861 = vmatpush.bf16.msra.mxu0 %v1814
        %1862 = vmatpush.bf16.msra.mxu0 %v1813
        %1863 = vmatpush.bf16.msra.mxu0 %v1812
        %1864 = vmatpush.bf16.msra.mxu0 %v1811
        %1865 = vmatpush.bf16.msra.mxu0 %v1810
        %1866 = vmatmul.bf16.gmra.mxu0 %v1697
        %v1867 = vpop.f32.mrf.mxu0
        %v1868 = vadd.f32 %v1844, %v1867
        %v1869 = vpop.f32.mrf.mxu0
        %v1870 = vadd.f32 %v1846, %v1869
        %1871 = vmatmul.bf16.gmra.mxu0 %v1699
        %v1872 = vpop.f32.mrf.mxu0
        %v1873 = vadd.f32 %v1849, %v1872
        %v1874 = vpop.f32.mrf.mxu0
        %v1875 = vadd.f32 %v1851, %v1874
        %1876 = vmatmul.bf16.gmra.mxu0 %v1701
        %v1877 = vpop.f32.mrf.mxu0
        %v1878 = vadd.f32 %v1854, %v1877
        %v1879 = vpop.f32.mrf.mxu0
        %v1880 = vadd.f32 %v1856, %v1879
        %1881 = vdwg.mxu0
        %v1882 = vpack.c.bf16 %v1868, %v1868
        %v1883 = vpack.c.bf16 %v1870, %v1870
        %v1884 = vpack.c.bf16 %v1873, %v1873
        %v1885 = vpack.c.bf16 %v1875, %v1875
        %v1886 = vpack.c.bf16 %v1878, %v1878
        %v1887 = vpack.c.bf16 %v1880, %v1880
        %1888 = vst [vmem:[%s415] sm:$0xf] %v1882
        %1889 = vst [vmem:[%s415 + $0x4] sm:$0xf] %v1883
        %1890 = vst [vmem:[%s415 + $0x8] sm:$0xf] %v1884
        %1891 = vst [vmem:[%s415 + $0xc] sm:$0xf] %v1885
        %1892 = vst [vmem:[%s415 + $0x10] sm:$0xf] %v1886
        %1893 = vst [vmem:[%s415 + $0x14] sm:$0xf] %v1887
        %s1894 = smul.u32 6, %s23
        %p1895 = scmp.lt.s32.totalorder %s1894, 11
        %s1896 = scalar_select %p1895, %s1894, 11
        %s1897 = smul.addr %s1896, 4
        %s1898 = scalar_lea.vmem %s9, %s1897
        // Predicated region
        $region77: #{smoothnet_forward.1} parent=55 // pred_check
          %p1899 = pneg %p235
        $region78: #{smoothnet_forward.1} parent=55 // pred_check_branch
          %1901 = sbr.rel (%p1899) target = $region80
        $region79: #{smoothnet_forward.1} parent=55 // pred_region
          %s1902 = smul.u32 6, %s23
        $region80: #{smoothnet_forward.1} parent=55 // pred_fallthru
          _
      $region56: #{smoothnet_forward.1} parent=5 // pred_fallthru
        _
      %p1903 = scmp.le.s32.totalorder 2, %s18
      // Predicated region
      $region81: #{smoothnet_forward.1} parent=5 // pred_check
        %p1904 = pneg %p1903
      $region82: #{smoothnet_forward.1} parent=5 // pred_check_branch
        %1906 = sbr.rel (%p1904) target = $region84
      $region83: #{smoothnet_forward.1} parent=5 // pred_region
        %s1907 = ssub.s32 %s18, 2
        // Predicated region
        $region85: #{smoothnet_forward.1} parent=83 // pred_check
          %p1908 = pneg %p241
        $region86: #{smoothnet_forward.1} parent=83 // pred_check_branch
          %1910 = sbr.rel (%p1908) target = $region88
        $region87: #{smoothnet_forward.1} parent=83 // pred_region
          %s1911 = smul.u32 6, %s24
          %p1912 = scmp.lt.s32.totalorder %s1911, 11
          %s1913 = scalar_select %p1912, %s1911, 11
          %s1914 = smul.addr %s1913, 4
          %s1915 = scalar_lea.vmem %s9, %s1914
        $region88: #{smoothnet_forward.1} parent=83 // pred_fallthru
          _
      $region84: #{smoothnet_forward.1} parent=5 // pred_fallthru
        _
    $region6: #{smoothnet_forward.1} parent=1 // loop_footer
      %s22 = sadd.s32 1, %s18
    $region7: #{smoothnet_forward.1} parent=1 // loop_footer_branch
      %17 = sbr.rel target = $region3
    $region8: #{smoothnet_forward.1} parent=1 // loop_exit
      _
    %1916 = vsyncpa [#allocation3], 1
    %s1917 = scalar_lea.sflag [#allocation3], 1
    %1918 = vsyncpa %s1917, 1
    %1919 = vsyncpa [#allocation5], 1
    %1920 = vsyncpa [#allocation8], 1

</llo_original>
